<compile_context>
chip_gen: v6e
topology: v6e:2x2x1
jax: 0.10.0
libtpu: 0.0.40
codegen_flags: <defaults>
</compile_context>

<pallas_src>
import jax
import jax.numpy as jnp
import numpy as np
from jax import lax
from jax.experimental import pallas as pl
from jax.experimental.pallas import tpu as pltpu


def _make_lstm_kernel(num_layers, hidden):
    H = hidden
    L = num_layers

    def kernel(*refs):
        # refs layout (no grid -> whole arrays resident in VMEM):
        #   [0]                x_ref      (T, B, I)       bf16, time-major
        #   [1+3l, 2+3l, 3+3l] per layer: w_ih (in_dim,4H) bf16,
        #                                 w_hh (H,4H)      bf16,
        #                                 b    (1,4H)      f32
        #                      (g-gate columns of all three pre-scaled x2)
        #   [1+3L]             w_out_ref  (H, C) f32
        #   [2+3L]             b_out_ref  (1, C) f32
        #   [3+3L]             out_ref    (B, C) f32
        #   [4+3L]             gx_ref     (T, B, 4H) f32  scratch (hoisted x-proj)
        #   [5+3L]             h_slab_ref (T, B, H)  bf16 scratch (inter-layer h)
        x_ref = refs[0]
        layer_refs = refs[1:1 + 3 * L]
        w_out_ref = refs[1 + 3 * L]
        b_out_ref = refs[2 + 3 * L]
        out_ref = refs[3 + 3 * L]
        gx_ref = refs[4 + 3 * L]
        h_slab_ref = refs[5 + 3 * L]

        T = x_ref.shape[0]
        B = x_ref.shape[1]

        h_last = None
        for l in range(L):
            w_ih = layer_refs[3 * l][...]       # (in_dim, 4H) bf16
            w_hh = layer_refs[3 * l + 1][...]   # (H, 4H)      bf16
            b = layer_refs[3 * l + 2][...]      # (1, 4H)      f32

            # ---- Hoisted input projection (one big MXU matmul, T*B rows),
            # bias folded in here once so the step body has no bias add.
            if l == 0:
                inp_slab = x_ref[...]           # (T, B, I) bf16
            else:
                inp_slab = h_slab_ref[...]      # (T, B, H) bf16
            in_dim = inp_slab.shape[-1]
            gx = jnp.dot(inp_slab.reshape(T * B, in_dim), w_ih,
                         preferred_element_type=jnp.float32)
            gx_ref[...] = (gx + b).reshape(T, B, 4 * H)

            is_last_layer = (l == L - 1)

            # ---- Serial recurrence: only h @ W_hh + precomputed gates_x[t].
            def step(t, carry, w_hh=w_hh, is_last_layer=is_last_layer):
                h, c = carry
                gates = gx_ref[t] + jnp.dot(h.astype(jnp.bfloat16), w_hh,
                                            preferred_element_type=jnp.float32)
                # Single full-vreg sigmoid over (B, 4H); g-gate columns were
                # pre-scaled x2 so tanh(z) = 2*sigmoid(2z) - 1.
                s = jax.nn.sigmoid(gates)
                i_g = s[:, 0 * H:1 * H]
                f_g = s[:, 1 * H:2 * H]
                g_g = 2.0 * s[:, 2 * H:3 * H] - 1.0
                o_g = s[:, 3 * H:4 * H]

                # State update in f32.
                c_new = f_g * c + i_g * g_g
                h_new = o_g * jnp.tanh(c_new)
                if not is_last_layer:
                    # Feed the full (T,B,H) h slab to the next layer's
                    # hoisted projection.
                    h_slab_ref[t] = h_new.astype(jnp.bfloat16)
                return h_new, c_new

            h0 = jnp.zeros((B, H), jnp.float32)
            c0 = jnp.zeros((B, H), jnp.float32)
            # Short fixed trip-count: fully unroll for LLO scheduler visibility.
            h_last, _ = lax.fori_loop(0, T, step, (h0, c0), unroll=True)

        # Classifier head on the last-step top-layer hidden state (tiny f32
        # matmul, off the recurrence critical path).
        logits = (jnp.dot(h_last, w_out_ref[...],
                          preferred_element_type=jnp.float32)
                  + b_out_ref[...])
        out_ref[...] = logits.astype(out_ref.dtype)

    return kernel


def _prep_layer_weights(w_ih, w_hh, b, hidden):
    """Kernel-ready per-layer weights.

    Pre-scale the g-gate column block (cols 2H:3H) of W_ih, W_hh and b by 2
    so the kernel can use one fused sigmoid (tanh(z) = 2*sigmoid(2z)-1), then
    cast weights to bf16 (x2 is an exponent bump, so scale-then-cast equals
    cast-then-scale exactly).  Bias stays f32.
    """
    H = hidden
    col_scale = jnp.ones((4 * H,), jnp.float32).at[2 * H:3 * H].set(2.0)
    w_ih_k = (w_ih * col_scale).astype(jnp.bfloat16)
    w_hh_k = (w_hh * col_scale).astype(jnp.bfloat16)
    b_k = b * col_scale
    return w_ih_k, w_hh_k, b_k


def lstm_classifier_forward(x, params, *, num_layers, hidden, num_classes):
    """x: (B, T, I) batch_first (PyTorch convention). Returns (B, C) logits."""
    B, T, I = x.shape
    H = hidden

    # Time-major + bf16 so the kernel indexes the leading axis each step and
    # feeds the MXU directly (accumulation stays f32).
    x_tm = jnp.transpose(x, (1, 0, 2)).astype(jnp.bfloat16)  # (T, B, I)

    inputs = [x_tm]
    for l in range(num_layers):
        w_ih, w_hh, b = params["layers"][l]
        inputs += list(_prep_layer_weights(w_ih, w_hh, b, H))
    inputs += [params["w_out"], params["b_out"]]

    kernel = _make_lstm_kernel(num_layers, hidden)

    # Explicit VMEM placement for every operand and the output (no reliance
    # on default ANY placement).
    vmem_spec = pl.BlockSpec(memory_space=pltpu.MemorySpace.VMEM)

    return pl.pallas_call(
        kernel,
        out_shape=jax.ShapeDtypeStruct((B, num_classes), jnp.float32),
        in_specs=[vmem_spec] * len(inputs),
        out_specs=vmem_spec,
        scratch_shapes=[
            pltpu.VMEM((T, B, 4 * H), jnp.float32),   # hoisted gates_x slab
            pltpu.VMEM((T, B, H), jnp.bfloat16),      # inter-layer h slab
        ],
    )(*inputs)


def init_params(key, input_size, hidden, num_layers, num_classes):
    """Deterministic init mirroring nn.LSTM / nn.Linear parameter shapes.

    Stored in full f32, PyTorch gate order (i, f, g, o), pre-transposed:
        w_ih: (in_dim, 4H)   (= weight_ih_l{k}.T)
        w_hh: (H, 4H)        (= weight_hh_l{k}.T)
        b   : (1, 4H)        (= b_ih + b_hh; only their sum matters forward)
    The x2 g-gate scaling / bf16 cast for the kernel happens in the wrapper,
    so these params are also what the f32 reference uses (true f32-weight
    parity check).
    """
    H = hidden
    scale = 1.0 / np.sqrt(H)
    layers = []
    for l in range(num_layers):
        in_dim = input_size if l == 0 else H
        key, k1, k2, k3 = jax.random.split(key, 4)
        w_ih = jax.random.uniform(k1, (in_dim, 4 * H), jnp.float32, -scale, scale)
        w_hh = jax.random.uniform(k2, (H, 4 * H), jnp.float32, -scale, scale)
        b = jax.random.uniform(k3, (1, 4 * H), jnp.float32, -scale, scale)
        layers.append((w_ih, w_hh, b))
    key, k1, k2 = jax.random.split(key, 3)
    w_out = jax.random.uniform(k1, (H, num_classes), jnp.float32, -scale, scale)
    b_out = jax.random.uniform(k2, (1, num_classes), jnp.float32, -scale, scale)
    return {"layers": layers, "w_out": w_out, "b_out": b_out}


def reference_forward(x, params, *, num_layers, hidden,
                      matmul_dtype=jnp.float32):
    """Pure-JAX reference (lax.scan over time) with PyTorch LSTM gate math.

    matmul_dtype=f32  -> PyTorch-semantics math with the stored f32 weights.
    matmul_dtype=bf16 -> same operand rounding as the kernel's MXU matmuls.
    """
    B, T, I = x.shape
    H, L = hidden, num_layers
    x_tm = jnp.transpose(x, (1, 0, 2)).astype(jnp.float32)  # (T, B, I)

    def step(carry, x_t):
        h_all, c_all = carry  # (L, B, H) each
        inp = x_t
        new_h, new_c = [], []
        for l in range(L):
            w_ih, w_hh, b = params["layers"][l]
            xw = jnp.dot(inp.astype(matmul_dtype), w_ih.astype(matmul_dtype),
                         preferred_element_type=jnp.float32)
            hw = jnp.dot(h_all[l].astype(matmul_dtype),
                         w_hh.astype(matmul_dtype),
                         preferred_element_type=jnp.float32)
            gates = xw + hw + b
            i_g = jax.nn.sigmoid(gates[:, 0 * H:1 * H])
            f_g = jax.nn.sigmoid(gates[:, 1 * H:2 * H])
            g_g = jnp.tanh(gates[:, 2 * H:3 * H])
            o_g = jax.nn.sigmoid(gates[:, 3 * H:4 * H])
            c_n = f_g * c_all[l] + i_g * g_g
            h_n = o_g * jnp.tanh(c_n)
            new_h.append(h_n)
            new_c.append(c_n)
            inp = h_n
        return (jnp.stack(new_h), jnp.stack(new_c)), inp

    h0 = jnp.zeros((L, B, H), jnp.float32)
    c0 = jnp.zeros((L, B, H), jnp.float32)
    (_, _), hs = lax.scan(step, (h0, c0), x_tm)
    last = hs[-1]  # (B, H) = output[:, -1, :] of the top layer
    return last @ params["w_out"] + params["b_out"]


if __name__ == "__main__":
    # Small shapes consistent with the module's forward:
    # inputSize=16, hiddenSize=32, classCount=4, layerCount=2, seq=8, batch=8.
    B, T, I = 8, 8, 16
    H, C, L = 32, 4, 2

    key = jax.random.PRNGKey(0)
    key, kx = jax.random.split(key)
    x = jax.random.normal(kx, (B, T, I), jnp.float32)

    params = init_params(key, I, H, L, C)

    out = lstm_classifier_forward(x, params, num_layers=L, hidden=H,
                                  num_classes=C)
    out = jax.block_until_ready(out)

    # 1) Kernel-consistent reference (bf16 matmul operands, f32 accumulation
    #    and f32 gate/state math) — tight check of the recurrence logic and
    #    of the fused-sigmoid gate formulation.
    ref_bf16 = reference_forward(x, params, num_layers=L, hidden=H,
                                 matmul_dtype=jnp.bfloat16)
    np.testing.assert_allclose(np.asarray(out), np.asarray(ref_bf16),
                               rtol=3e-3, atol=3e-3)

    # 2) Full-f32 PyTorch-semantics reference with the stored f32 weights —
    #    looser tolerance covers the deliberate bf16 rounding of weights and
    #    matmul operands inside the kernel.
    ref_f32 = reference_forward(x, params, num_layers=L, hidden=H,
                                matmul_dtype=jnp.float32)
    np.testing.assert_allclose(np.asarray(out), np.asarray(ref_f32),
                               rtol=1e-1, atol=1e-1)

    print("KERNEL_OK")
</pallas_src>

<mosaic_0001>
module attributes {stable_mosaic.version = 11 : i64} {
  func.func @kernel(%arg0: memref<8x8x16xbf16, #tpu.memory_space<vmem>>, %arg1: memref<16x128xbf16, #tpu.memory_space<vmem>>, %arg2: memref<32x128xbf16, #tpu.memory_space<vmem>>, %arg3: memref<1x128xf32, #tpu.memory_space<vmem>>, %arg4: memref<32x128xbf16, #tpu.memory_space<vmem>>, %arg5: memref<32x128xbf16, #tpu.memory_space<vmem>>, %arg6: memref<1x128xf32, #tpu.memory_space<vmem>>, %arg7: memref<32x4xf32, #tpu.memory_space<vmem>>, %arg8: memref<1x4xf32, #tpu.memory_space<vmem>>, %arg9: memref<8x4xf32, #tpu.memory_space<vmem>>, %arg10: memref<8x8x128xf32, #tpu.memory_space<vmem>>, %arg11: memref<8x8x32xbf16, #tpu.memory_space<vmem>>) attributes {dimension_semantics = [], scalar_prefetch = 0 : i64, scratch_operands = 2 : i64, tpu.core_type = #tpu.core_type<tc>} {
    %c0 = arith.constant 0 : index
    %c0_0 = arith.constant 0 : index
    %0 = vector.load %arg1[%c0, %c0_0] : memref<16x128xbf16, #tpu.memory_space<vmem>>, vector<16x128xbf16>
    %c0_1 = arith.constant 0 : index
    %c0_2 = arith.constant 0 : index
    %1 = vector.load %arg2[%c0_1, %c0_2] : memref<32x128xbf16, #tpu.memory_space<vmem>>, vector<32x128xbf16>
    %c0_3 = arith.constant 0 : index
    %c0_4 = arith.constant 0 : index
    %2 = vector.load %arg3[%c0_3, %c0_4] : memref<1x128xf32, #tpu.memory_space<vmem>>, vector<1x128xf32>
    %c0_5 = arith.constant 0 : index
    %c0_6 = arith.constant 0 : index
    %c0_7 = arith.constant 0 : index
    %3 = vector.load %arg0[%c0_5, %c0_6, %c0_7] : memref<8x8x16xbf16, #tpu.memory_space<vmem>>, vector<8x8x16xbf16>
    %4 = vector.shape_cast %3 : vector<8x8x16xbf16> to vector<64x16xbf16>
    %cst = arith.constant dense<0.000000e+00> : vector<64x128xf32>
    %5 = tpu.matmul %4, %0, %cst {dimension_numbers = #tpu.dot_dimension_numbers<[1], [0], [0], [1], [0, 0, 1, 1], [], []>} : vector<64x16xbf16>, vector<16x128xbf16>, vector<64x128xf32> -> vector<64x128xf32>
    %6 = vector.broadcast %2 : vector<1x128xf32> to vector<64x128xf32>
    %7 = arith.addf %5, %6 : vector<64x128xf32>
    %8 = vector.shape_cast %7 : vector<64x128xf32> to vector<8x8x128xf32>
    %c0_8 = arith.constant 0 : index
    %c0_9 = arith.constant 0 : index
    %c0_10 = arith.constant 0 : index
    %9 = vector.load %arg10[%c0_8, %c0_9, %c0_10] : memref<8x8x128xf32, #tpu.memory_space<vmem>>, vector<8x8x128xf32>
    tpu.vector_store %arg10[%c0_8, %c0_9, %c0_10], %8 {strides = array<i32>} : memref<8x8x128xf32, #tpu.memory_space<vmem>>, vector<8x8x128xf32>,
    %cst_11 = arith.constant 0.000000e+00 : f32
    %10 = vector.broadcast %cst_11 : f32 to vector<8x32xf32>
    %cst_12 = arith.constant 0.000000e+00 : f32
    %11 = vector.broadcast %cst_12 : f32 to vector<8x32xf32>
    %c0_i32 = arith.constant 0 : i32
    %12 = arith.index_cast %c0_i32 : i32 to index
    %c0_13 = arith.constant 0 : index
    %c0_14 = arith.constant 0 : index
    %13 = vector.load %arg10[%12, %c0_13, %c0_14] : memref<8x8x128xf32, #tpu.memory_space<vmem>>, vector<1x8x128xf32>
    %14 = vector.shape_cast %13 : vector<1x8x128xf32> to vector<8x128xf32>
    %15 = arith.truncf %10 : vector<8x32xf32> to vector<8x32xbf16>
    %cst_15 = arith.constant dense<0.000000e+00> : vector<8x128xf32>
    %16 = tpu.matmul %15, %1, %cst_15 {dimension_numbers = #tpu.dot_dimension_numbers<[1], [0], [0], [1], [0, 0, 1, 1], [], []>} : vector<8x32xbf16>, vector<32x128xbf16>, vector<8x128xf32> -> vector<8x128xf32>
    %17 = arith.addf %14, %16 : vector<8x128xf32>
    %18 = arith.negf %17 : vector<8x128xf32>
    %19 = math.exp %18 : vector<8x128xf32>
    %cst_16 = arith.constant 1.000000e+00 : f32
    %20 = vector.broadcast %cst_16 : f32 to vector<8x128xf32>
    %21 = arith.addf %20, %19 : vector<8x128xf32>
    %22 = arith.divf %20, %21 : vector<8x128xf32>
    %23 = vector.extract_strided_slice %22 {offsets = [0, 0], sizes = [8, 32], strides = [1, 1]} : vector<8x128xf32> to vector<8x32xf32>
    %24 = vector.extract_strided_slice %22 {offsets = [0, 32], sizes = [8, 32], strides = [1, 1]} : vector<8x128xf32> to vector<8x32xf32>
    %25 = vector.extract_strided_slice %22 {offsets = [0, 64], sizes = [8, 32], strides = [1, 1]} : vector<8x128xf32> to vector<8x32xf32>
    %cst_17 = arith.constant 2.000000e+00 : f32
    %26 = vector.broadcast %cst_17 : f32 to vector<8x32xf32>
    %27 = arith.mulf %26, %25 : vector<8x32xf32>
    %cst_18 = arith.constant 1.000000e+00 : f32
    %28 = vector.broadcast %cst_18 : f32 to vector<8x32xf32>
    %29 = arith.subf %27, %28 : vector<8x32xf32>
    %30 = vector.extract_strided_slice %22 {offsets = [0, 96], sizes = [8, 32], strides = [1, 1]} : vector<8x128xf32> to vector<8x32xf32>
    %31 = arith.mulf %24, %11 : vector<8x32xf32>
    %32 = arith.mulf %23, %29 : vector<8x32xf32>
    %33 = arith.addf %31, %32 : vector<8x32xf32>
    %34 = math.tanh %33 : vector<8x32xf32>
    %35 = arith.mulf %30, %34 : vector<8x32xf32>
    %36 = arith.truncf %35 : vector<8x32xf32> to vector<8x32xbf16>
    %37 = arith.index_cast %c0_i32 : i32 to index
    %c0_19 = arith.constant 0 : index
    %c0_20 = arith.constant 0 : index
    %38 = vector.load %arg11[%37, %c0_19, %c0_20] : memref<8x8x32xbf16, #tpu.memory_space<vmem>>, vector<1x8x32xbf16>
    %39 = vector.shape_cast %38 : vector<1x8x32xbf16> to vector<8x32xbf16>
    %40 = vector.shape_cast %36 : vector<8x32xbf16> to vector<1x8x32xbf16>
    tpu.vector_store %arg11[%37, %c0_19, %c0_20], %40 {strides = array<i32>} : memref<8x8x32xbf16, #tpu.memory_space<vmem>>, vector<1x8x32xbf16>,
    %c1_i32 = arith.constant 1 : i32
    %41 = arith.index_cast %c1_i32 : i32 to index
    %c0_21 = arith.constant 0 : index
    %c0_22 = arith.constant 0 : index
    %42 = vector.load %arg10[%41, %c0_21, %c0_22] : memref<8x8x128xf32, #tpu.memory_space<vmem>>, vector<1x8x128xf32>
    %43 = vector.shape_cast %42 : vector<1x8x128xf32> to vector<8x128xf32>
    %44 = arith.truncf %35 : vector<8x32xf32> to vector<8x32xbf16>
    %cst_23 = arith.constant dense<0.000000e+00> : vector<8x128xf32>
    %45 = tpu.matmul %44, %1, %cst_23 {dimension_numbers = #tpu.dot_dimension_numbers<[1], [0], [0], [1], [0, 0, 1, 1], [], []>} : vector<8x32xbf16>, vector<32x128xbf16>, vector<8x128xf32> -> vector<8x128xf32>
    %46 = arith.addf %43, %45 : vector<8x128xf32>
    %47 = arith.negf %46 : vector<8x128xf32>
    %48 = math.exp %47 : vector<8x128xf32>
    %cst_24 = arith.constant 1.000000e+00 : f32
    %49 = vector.broadcast %cst_24 : f32 to vector<8x128xf32>
    %50 = arith.addf %49, %48 : vector<8x128xf32>
    %51 = arith.divf %49, %50 : vector<8x128xf32>
    %52 = vector.extract_strided_slice %51 {offsets = [0, 0], sizes = [8, 32], strides = [1, 1]} : vector<8x128xf32> to vector<8x32xf32>
    %53 = vector.extract_strided_slice %51 {offsets = [0, 32], sizes = [8, 32], strides = [1, 1]} : vector<8x128xf32> to vector<8x32xf32>
    %54 = vector.extract_strided_slice %51 {offsets = [0, 64], sizes = [8, 32], strides = [1, 1]} : vector<8x128xf32> to vector<8x32xf32>
    %cst_25 = arith.constant 2.000000e+00 : f32
    %55 = vector.broadcast %cst_25 : f32 to vector<8x32xf32>
    %56 = arith.mulf %55, %54 : vector<8x32xf32>
    %cst_26 = arith.constant 1.000000e+00 : f32
    %57 = vector.broadcast %cst_26 : f32 to vector<8x32xf32>
    %58 = arith.subf %56, %57 : vector<8x32xf32>
    %59 = vector.extract_strided_slice %51 {offsets = [0, 96], sizes = [8, 32], strides = [1, 1]} : vector<8x128xf32> to vector<8x32xf32>
    %60 = arith.mulf %53, %33 : vector<8x32xf32>
    %61 = arith.mulf %52, %58 : vector<8x32xf32>
    %62 = arith.addf %60, %61 : vector<8x32xf32>
    %63 = math.tanh %62 : vector<8x32xf32>
    %64 = arith.mulf %59, %63 : vector<8x32xf32>
    %65 = arith.truncf %64 : vector<8x32xf32> to vector<8x32xbf16>
    %66 = arith.index_cast %c1_i32 : i32 to index
    %c0_27 = arith.constant 0 : index
    %c0_28 = arith.constant 0 : index
    %67 = vector.load %arg11[%66, %c0_27, %c0_28] : memref<8x8x32xbf16, #tpu.memory_space<vmem>>, vector<1x8x32xbf16>
    %68 = vector.shape_cast %67 : vector<1x8x32xbf16> to vector<8x32xbf16>
    %69 = vector.shape_cast %65 : vector<8x32xbf16> to vector<1x8x32xbf16>
    tpu.vector_store %arg11[%66, %c0_27, %c0_28], %69 {strides = array<i32>} : memref<8x8x32xbf16, #tpu.memory_space<vmem>>, vector<1x8x32xbf16>,
    %c2_i32 = arith.constant 2 : i32
    %70 = arith.index_cast %c2_i32 : i32 to index
    %c0_29 = arith.constant 0 : index
    %c0_30 = arith.constant 0 : index
    %71 = vector.load %arg10[%70, %c0_29, %c0_30] : memref<8x8x128xf32, #tpu.memory_space<vmem>>, vector<1x8x128xf32>
    %72 = vector.shape_cast %71 : vector<1x8x128xf32> to vector<8x128xf32>
    %73 = arith.truncf %64 : vector<8x32xf32> to vector<8x32xbf16>
    %cst_31 = arith.constant dense<0.000000e+00> : vector<8x128xf32>
    %74 = tpu.matmul %73, %1, %cst_31 {dimension_numbers = #tpu.dot_dimension_numbers<[1], [0], [0], [1], [0, 0, 1, 1], [], []>} : vector<8x32xbf16>, vector<32x128xbf16>, vector<8x128xf32> -> vector<8x128xf32>
    %75 = arith.addf %72, %74 : vector<8x128xf32>
    %76 = arith.negf %75 : vector<8x128xf32>
    %77 = math.exp %76 : vector<8x128xf32>
    %cst_32 = arith.constant 1.000000e+00 : f32
    %78 = vector.broadcast %cst_32 : f32 to vector<8x128xf32>
    %79 = arith.addf %78, %77 : vector<8x128xf32>
    %80 = arith.divf %78, %79 : vector<8x128xf32>
    %81 = vector.extract_strided_slice %80 {offsets = [0, 0], sizes = [8, 32], strides = [1, 1]} : vector<8x128xf32> to vector<8x32xf32>
    %82 = vector.extract_strided_slice %80 {offsets = [0, 32], sizes = [8, 32], strides = [1, 1]} : vector<8x128xf32> to vector<8x32xf32>
    %83 = vector.extract_strided_slice %80 {offsets = [0, 64], sizes = [8, 32], strides = [1, 1]} : vector<8x128xf32> to vector<8x32xf32>
    %cst_33 = arith.constant 2.000000e+00 : f32
    %84 = vector.broadcast %cst_33 : f32 to vector<8x32xf32>
    %85 = arith.mulf %84, %83 : vector<8x32xf32>
    %cst_34 = arith.constant 1.000000e+00 : f32
    %86 = vector.broadcast %cst_34 : f32 to vector<8x32xf32>
    %87 = arith.subf %85, %86 : vector<8x32xf32>
    %88 = vector.extract_strided_slice %80 {offsets = [0, 96], sizes = [8, 32], strides = [1, 1]} : vector<8x128xf32> to vector<8x32xf32>
    %89 = arith.mulf %82, %62 : vector<8x32xf32>
    %90 = arith.mulf %81, %87 : vector<8x32xf32>
    %91 = arith.addf %89, %90 : vector<8x32xf32>
    %92 = math.tanh %91 : vector<8x32xf32>
    %93 = arith.mulf %88, %92 : vector<8x32xf32>
    %94 = arith.truncf %93 : vector<8x32xf32> to vector<8x32xbf16>
    %95 = arith.index_cast %c2_i32 : i32 to index
    %c0_35 = arith.constant 0 : index
    %c0_36 = arith.constant 0 : index
    %96 = vector.load %arg11[%95, %c0_35, %c0_36] : memref<8x8x32xbf16, #tpu.memory_space<vmem>>, vector<1x8x32xbf16>
    %97 = vector.shape_cast %96 : vector<1x8x32xbf16> to vector<8x32xbf16>
    %98 = vector.shape_cast %94 : vector<8x32xbf16> to vector<1x8x32xbf16>
    tpu.vector_store %arg11[%95, %c0_35, %c0_36], %98 {strides = array<i32>} : memref<8x8x32xbf16, #tpu.memory_space<vmem>>, vector<1x8x32xbf16>,
    %c3_i32 = arith.constant 3 : i32
    %99 = arith.index_cast %c3_i32 : i32 to index
    %c0_37 = arith.constant 0 : index
    %c0_38 = arith.constant 0 : index
    %100 = vector.load %arg10[%99, %c0_37, %c0_38] : memref<8x8x128xf32, #tpu.memory_space<vmem>>, vector<1x8x128xf32>
    %101 = vector.shape_cast %100 : vector<1x8x128xf32> to vector<8x128xf32>
    %102 = arith.truncf %93 : vector<8x32xf32> to vector<8x32xbf16>
    %cst_39 = arith.constant dense<0.000000e+00> : vector<8x128xf32>
    %103 = tpu.matmul %102, %1, %cst_39 {dimension_numbers = #tpu.dot_dimension_numbers<[1], [0], [0], [1], [0, 0, 1, 1], [], []>} : vector<8x32xbf16>, vector<32x128xbf16>, vector<8x128xf32> -> vector<8x128xf32>
    %104 = arith.addf %101, %103 : vector<8x128xf32>
    %105 = arith.negf %104 : vector<8x128xf32>
    %106 = math.exp %105 : vector<8x128xf32>
    %cst_40 = arith.constant 1.000000e+00 : f32
    %107 = vector.broadcast %cst_40 : f32 to vector<8x128xf32>
    %108 = arith.addf %107, %106 : vector<8x128xf32>
    %109 = arith.divf %107, %108 : vector<8x128xf32>
    %110 = vector.extract_strided_slice %109 {offsets = [0, 0], sizes = [8, 32], strides = [1, 1]} : vector<8x128xf32> to vector<8x32xf32>
    %111 = vector.extract_strided_slice %109 {offsets = [0, 32], sizes = [8, 32], strides = [1, 1]} : vector<8x128xf32> to vector<8x32xf32>
    %112 = vector.extract_strided_slice %109 {offsets = [0, 64], sizes = [8, 32], strides = [1, 1]} : vector<8x128xf32> to vector<8x32xf32>
    %cst_41 = arith.constant 2.000000e+00 : f32
    %113 = vector.broadcast %cst_41 : f32 to vector<8x32xf32>
    %114 = arith.mulf %113, %112 : vector<8x32xf32>
    %cst_42 = arith.constant 1.000000e+00 : f32
    %115 = vector.broadcast %cst_42 : f32 to vector<8x32xf32>
    %116 = arith.subf %114, %115 : vector<8x32xf32>
    %117 = vector.extract_strided_slice %109 {offsets = [0, 96], sizes = [8, 32], strides = [1, 1]} : vector<8x128xf32> to vector<8x32xf32>
    %118 = arith.mulf %111, %91 : vector<8x32xf32>
    %119 = arith.mulf %110, %116 : vector<8x32xf32>
    %120 = arith.addf %118, %119 : vector<8x32xf32>
    %121 = math.tanh %120 : vector<8x32xf32>
    %122 = arith.mulf %117, %121 : vector<8x32xf32>
    %123 = arith.truncf %122 : vector<8x32xf32> to vector<8x32xbf16>
    %124 = arith.index_cast %c3_i32 : i32 to index
    %c0_43 = arith.constant 0 : index
    %c0_44 = arith.constant 0 : index
    %125 = vector.load %arg11[%124, %c0_43, %c0_44] : memref<8x8x32xbf16, #tpu.memory_space<vmem>>, vector<1x8x32xbf16>
    %126 = vector.shape_cast %125 : vector<1x8x32xbf16> to vector<8x32xbf16>
    %127 = vector.shape_cast %123 : vector<8x32xbf16> to vector<1x8x32xbf16>
    tpu.vector_store %arg11[%124, %c0_43, %c0_44], %127 {strides = array<i32>} : memref<8x8x32xbf16, #tpu.memory_space<vmem>>, vector<1x8x32xbf16>,
    %c4_i32 = arith.constant 4 : i32
    %128 = arith.index_cast %c4_i32 : i32 to index
    %c0_45 = arith.constant 0 : index
    %c0_46 = arith.constant 0 : index
    %129 = vector.load %arg10[%128, %c0_45, %c0_46] : memref<8x8x128xf32, #tpu.memory_space<vmem>>, vector<1x8x128xf32>
    %130 = vector.shape_cast %129 : vector<1x8x128xf32> to vector<8x128xf32>
    %131 = arith.truncf %122 : vector<8x32xf32> to vector<8x32xbf16>
    %cst_47 = arith.constant dense<0.000000e+00> : vector<8x128xf32>
    %132 = tpu.matmul %131, %1, %cst_47 {dimension_numbers = #tpu.dot_dimension_numbers<[1], [0], [0], [1], [0, 0, 1, 1], [], []>} : vector<8x32xbf16>, vector<32x128xbf16>, vector<8x128xf32> -> vector<8x128xf32>
    %133 = arith.addf %130, %132 : vector<8x128xf32>
    %134 = arith.negf %133 : vector<8x128xf32>
    %135 = math.exp %134 : vector<8x128xf32>
    %cst_48 = arith.constant 1.000000e+00 : f32
    %136 = vector.broadcast %cst_48 : f32 to vector<8x128xf32>
    %137 = arith.addf %136, %135 : vector<8x128xf32>
    %138 = arith.divf %136, %137 : vector<8x128xf32>
    %139 = vector.extract_strided_slice %138 {offsets = [0, 0], sizes = [8, 32], strides = [1, 1]} : vector<8x128xf32> to vector<8x32xf32>
    %140 = vector.extract_strided_slice %138 {offsets = [0, 32], sizes = [8, 32], strides = [1, 1]} : vector<8x128xf32> to vector<8x32xf32>
    %141 = vector.extract_strided_slice %138 {offsets = [0, 64], sizes = [8, 32], strides = [1, 1]} : vector<8x128xf32> to vector<8x32xf32>
    %cst_49 = arith.constant 2.000000e+00 : f32
    %142 = vector.broadcast %cst_49 : f32 to vector<8x32xf32>
    %143 = arith.mulf %142, %141 : vector<8x32xf32>
    %cst_50 = arith.constant 1.000000e+00 : f32
    %144 = vector.broadcast %cst_50 : f32 to vector<8x32xf32>
    %145 = arith.subf %143, %144 : vector<8x32xf32>
    %146 = vector.extract_strided_slice %138 {offsets = [0, 96], sizes = [8, 32], strides = [1, 1]} : vector<8x128xf32> to vector<8x32xf32>
    %147 = arith.mulf %140, %120 : vector<8x32xf32>
    %148 = arith.mulf %139, %145 : vector<8x32xf32>
    %149 = arith.addf %147, %148 : vector<8x32xf32>
    %150 = math.tanh %149 : vector<8x32xf32>
    %151 = arith.mulf %146, %150 : vector<8x32xf32>
    %152 = arith.truncf %151 : vector<8x32xf32> to vector<8x32xbf16>
    %153 = arith.index_cast %c4_i32 : i32 to index
    %c0_51 = arith.constant 0 : index
    %c0_52 = arith.constant 0 : index
    %154 = vector.load %arg11[%153, %c0_51, %c0_52] : memref<8x8x32xbf16, #tpu.memory_space<vmem>>, vector<1x8x32xbf16>
    %155 = vector.shape_cast %154 : vector<1x8x32xbf16> to vector<8x32xbf16>
    %156 = vector.shape_cast %152 : vector<8x32xbf16> to vector<1x8x32xbf16>
    tpu.vector_store %arg11[%153, %c0_51, %c0_52], %156 {strides = array<i32>} : memref<8x8x32xbf16, #tpu.memory_space<vmem>>, vector<1x8x32xbf16>,
    %c5_i32 = arith.constant 5 : i32
    %157 = arith.index_cast %c5_i32 : i32 to index
    %c0_53 = arith.constant 0 : index
    %c0_54 = arith.constant 0 : index
    %158 = vector.load %arg10[%157, %c0_53, %c0_54] : memref<8x8x128xf32, #tpu.memory_space<vmem>>, vector<1x8x128xf32>
    %159 = vector.shape_cast %158 : vector<1x8x128xf32> to vector<8x128xf32>
    %160 = arith.truncf %151 : vector<8x32xf32> to vector<8x32xbf16>
    %cst_55 = arith.constant dense<0.000000e+00> : vector<8x128xf32>
    %161 = tpu.matmul %160, %1, %cst_55 {dimension_numbers = #tpu.dot_dimension_numbers<[1], [0], [0], [1], [0, 0, 1, 1], [], []>} : vector<8x32xbf16>, vector<32x128xbf16>, vector<8x128xf32> -> vector<8x128xf32>
    %162 = arith.addf %159, %161 : vector<8x128xf32>
    %163 = arith.negf %162 : vector<8x128xf32>
    %164 = math.exp %163 : vector<8x128xf32>
    %cst_56 = arith.constant 1.000000e+00 : f32
    %165 = vector.broadcast %cst_56 : f32 to vector<8x128xf32>
    %166 = arith.addf %165, %164 : vector<8x128xf32>
    %167 = arith.divf %165, %166 : vector<8x128xf32>
    %168 = vector.extract_strided_slice %167 {offsets = [0, 0], sizes = [8, 32], strides = [1, 1]} : vector<8x128xf32> to vector<8x32xf32>
    %169 = vector.extract_strided_slice %167 {offsets = [0, 32], sizes = [8, 32], strides = [1, 1]} : vector<8x128xf32> to vector<8x32xf32>
    %170 = vector.extract_strided_slice %167 {offsets = [0, 64], sizes = [8, 32], strides = [1, 1]} : vector<8x128xf32> to vector<8x32xf32>
    %cst_57 = arith.constant 2.000000e+00 : f32
    %171 = vector.broadcast %cst_57 : f32 to vector<8x32xf32>
    %172 = arith.mulf %171, %170 : vector<8x32xf32>
    %cst_58 = arith.constant 1.000000e+00 : f32
    %173 = vector.broadcast %cst_58 : f32 to vector<8x32xf32>
    %174 = arith.subf %172, %173 : vector<8x32xf32>
    %175 = vector.extract_strided_slice %167 {offsets = [0, 96], sizes = [8, 32], strides = [1, 1]} : vector<8x128xf32> to vector<8x32xf32>
    %176 = arith.mulf %169, %149 : vector<8x32xf32>
    %177 = arith.mulf %168, %174 : vector<8x32xf32>
    %178 = arith.addf %176, %177 : vector<8x32xf32>
    %179 = math.tanh %178 : vector<8x32xf32>
    %180 = arith.mulf %175, %179 : vector<8x32xf32>
    %181 = arith.truncf %180 : vector<8x32xf32> to vector<8x32xbf16>
    %182 = arith.index_cast %c5_i32 : i32 to index
    %c0_59 = arith.constant 0 : index
    %c0_60 = arith.constant 0 : index
    %183 = vector.load %arg11[%182, %c0_59, %c0_60] : memref<8x8x32xbf16, #tpu.memory_space<vmem>>, vector<1x8x32xbf16>
    %184 = vector.shape_cast %183 : vector<1x8x32xbf16> to vector<8x32xbf16>
    %185 = vector.shape_cast %181 : vector<8x32xbf16> to vector<1x8x32xbf16>
    tpu.vector_store %arg11[%182, %c0_59, %c0_60], %185 {strides = array<i32>} : memref<8x8x32xbf16, #tpu.memory_space<vmem>>, vector<1x8x32xbf16>,
    %c6_i32 = arith.constant 6 : i32
    %186 = arith.index_cast %c6_i32 : i32 to index
    %c0_61 = arith.constant 0 : index
    %c0_62 = arith.constant 0 : index
    %187 = vector.load %arg10[%186, %c0_61, %c0_62] : memref<8x8x128xf32, #tpu.memory_space<vmem>>, vector<1x8x128xf32>
    %188 = vector.shape_cast %187 : vector<1x8x128xf32> to vector<8x128xf32>
    %189 = arith.truncf %180 : vector<8x32xf32> to vector<8x32xbf16>
    %cst_63 = arith.constant dense<0.000000e+00> : vector<8x128xf32>
    %190 = tpu.matmul %189, %1, %cst_63 {dimension_numbers = #tpu.dot_dimension_numbers<[1], [0], [0], [1], [0, 0, 1, 1], [], []>} : vector<8x32xbf16>, vector<32x128xbf16>, vector<8x128xf32> -> vector<8x128xf32>
    %191 = arith.addf %188, %190 : vector<8x128xf32>
    %192 = arith.negf %191 : vector<8x128xf32>
    %193 = math.exp %192 : vector<8x128xf32>
    %cst_64 = arith.constant 1.000000e+00 : f32
    %194 = vector.broadcast %cst_64 : f32 to vector<8x128xf32>
    %195 = arith.addf %194, %193 : vector<8x128xf32>
    %196 = arith.divf %194, %195 : vector<8x128xf32>
    %197 = vector.extract_strided_slice %196 {offsets = [0, 0], sizes = [8, 32], strides = [1, 1]} : vector<8x128xf32> to vector<8x32xf32>
    %198 = vector.extract_strided_slice %196 {offsets = [0, 32], sizes = [8, 32], strides = [1, 1]} : vector<8x128xf32> to vector<8x32xf32>
    %199 = vector.extract_strided_slice %196 {offsets = [0, 64], sizes = [8, 32], strides = [1, 1]} : vector<8x128xf32> to vector<8x32xf32>
    %cst_65 = arith.constant 2.000000e+00 : f32
    %200 = vector.broadcast %cst_65 : f32 to vector<8x32xf32>
    %201 = arith.mulf %200, %199 : vector<8x32xf32>
    %cst_66 = arith.constant 1.000000e+00 : f32
    %202 = vector.broadcast %cst_66 : f32 to vector<8x32xf32>
    %203 = arith.subf %201, %202 : vector<8x32xf32>
    %204 = vector.extract_strided_slice %196 {offsets = [0, 96], sizes = [8, 32], strides = [1, 1]} : vector<8x128xf32> to vector<8x32xf32>
    %205 = arith.mulf %198, %178 : vector<8x32xf32>
    %206 = arith.mulf %197, %203 : vector<8x32xf32>
    %207 = arith.addf %205, %206 : vector<8x32xf32>
    %208 = math.tanh %207 : vector<8x32xf32>
    %209 = arith.mulf %204, %208 : vector<8x32xf32>
    %210 = arith.truncf %209 : vector<8x32xf32> to vector<8x32xbf16>
    %211 = arith.index_cast %c6_i32 : i32 to index
    %c0_67 = arith.constant 0 : index
    %c0_68 = arith.constant 0 : index
    %212 = vector.load %arg11[%211, %c0_67, %c0_68] : memref<8x8x32xbf16, #tpu.memory_space<vmem>>, vector<1x8x32xbf16>
    %213 = vector.shape_cast %212 : vector<1x8x32xbf16> to vector<8x32xbf16>
    %214 = vector.shape_cast %210 : vector<8x32xbf16> to vector<1x8x32xbf16>
    tpu.vector_store %arg11[%211, %c0_67, %c0_68], %214 {strides = array<i32>} : memref<8x8x32xbf16, #tpu.memory_space<vmem>>, vector<1x8x32xbf16>,
    %c7_i32 = arith.constant 7 : i32
    %215 = arith.index_cast %c7_i32 : i32 to index
    %c0_69 = arith.constant 0 : index
    %c0_70 = arith.constant 0 : index
    %216 = vector.load %arg10[%215, %c0_69, %c0_70] : memref<8x8x128xf32, #tpu.memory_space<vmem>>, vector<1x8x128xf32>
    %217 = vector.shape_cast %216 : vector<1x8x128xf32> to vector<8x128xf32>
    %218 = arith.truncf %209 : vector<8x32xf32> to vector<8x32xbf16>
    %cst_71 = arith.constant dense<0.000000e+00> : vector<8x128xf32>
    %219 = tpu.matmul %218, %1, %cst_71 {dimension_numbers = #tpu.dot_dimension_numbers<[1], [0], [0], [1], [0, 0, 1, 1], [], []>} : vector<8x32xbf16>, vector<32x128xbf16>, vector<8x128xf32> -> vector<8x128xf32>
    %220 = arith.addf %217, %219 : vector<8x128xf32>
    %221 = arith.negf %220 : vector<8x128xf32>
    %222 = math.exp %221 : vector<8x128xf32>
    %cst_72 = arith.constant 1.000000e+00 : f32
    %223 = vector.broadcast %cst_72 : f32 to vector<8x128xf32>
    %224 = arith.addf %223, %222 : vector<8x128xf32>
    %225 = arith.divf %223, %224 : vector<8x128xf32>
    %226 = vector.extract_strided_slice %225 {offsets = [0, 0], sizes = [8, 32], strides = [1, 1]} : vector<8x128xf32> to vector<8x32xf32>
    %227 = vector.extract_strided_slice %225 {offsets = [0, 32], sizes = [8, 32], strides = [1, 1]} : vector<8x128xf32> to vector<8x32xf32>
    %228 = vector.extract_strided_slice %225 {offsets = [0, 64], sizes = [8, 32], strides = [1, 1]} : vector<8x128xf32> to vector<8x32xf32>
    %cst_73 = arith.constant 2.000000e+00 : f32
    %229 = vector.broadcast %cst_73 : f32 to vector<8x32xf32>
    %230 = arith.mulf %229, %228 : vector<8x32xf32>
    %cst_74 = arith.constant 1.000000e+00 : f32
    %231 = vector.broadcast %cst_74 : f32 to vector<8x32xf32>
    %232 = arith.subf %230, %231 : vector<8x32xf32>
    %233 = vector.extract_strided_slice %225 {offsets = [0, 96], sizes = [8, 32], strides = [1, 1]} : vector<8x128xf32> to vector<8x32xf32>
    %234 = arith.mulf %227, %207 : vector<8x32xf32>
    %235 = arith.mulf %226, %232 : vector<8x32xf32>
    %236 = arith.addf %234, %235 : vector<8x32xf32>
    %237 = math.tanh %236 : vector<8x32xf32>
    %238 = arith.mulf %233, %237 : vector<8x32xf32>
    %239 = arith.truncf %238 : vector<8x32xf32> to vector<8x32xbf16>
    %240 = arith.index_cast %c7_i32 : i32 to index
    %c0_75 = arith.constant 0 : index
    %c0_76 = arith.constant 0 : index
    %241 = vector.load %arg11[%240, %c0_75, %c0_76] : memref<8x8x32xbf16, #tpu.memory_space<vmem>>, vector<1x8x32xbf16>
    %242 = vector.shape_cast %241 : vector<1x8x32xbf16> to vector<8x32xbf16>
    %243 = vector.shape_cast %239 : vector<8x32xbf16> to vector<1x8x32xbf16>
    tpu.vector_store %arg11[%240, %c0_75, %c0_76], %243 {strides = array<i32>} : memref<8x8x32xbf16, #tpu.memory_space<vmem>>, vector<1x8x32xbf16>,
    %c8_i32 = arith.constant 8 : i32
    %c0_77 = arith.constant 0 : index
    %c0_78 = arith.constant 0 : index
    %244 = vector.load %arg4[%c0_77, %c0_78] : memref<32x128xbf16, #tpu.memory_space<vmem>>, vector<32x128xbf16>
    %c0_79 = arith.constant 0 : index
    %c0_80 = arith.constant 0 : index
    %245 = vector.load %arg5[%c0_79, %c0_80] : memref<32x128xbf16, #tpu.memory_space<vmem>>, vector<32x128xbf16>
    %c0_81 = arith.constant 0 : index
    %c0_82 = arith.constant 0 : index
    %246 = vector.load %arg6[%c0_81, %c0_82] : memref<1x128xf32, #tpu.memory_space<vmem>>, vector<1x128xf32>
    %c0_83 = arith.constant 0 : index
    %c0_84 = arith.constant 0 : index
    %c0_85 = arith.constant 0 : index
    %247 = vector.load %arg11[%c0_83, %c0_84, %c0_85] : memref<8x8x32xbf16, #tpu.memory_space<vmem>>, vector<8x8x32xbf16>
    %248 = vector.shape_cast %247 : vector<8x8x32xbf16> to vector<64x32xbf16>
    %cst_86 = arith.constant dense<0.000000e+00> : vector<64x128xf32>
    %249 = tpu.matmul %248, %244, %cst_86 {dimension_numbers = #tpu.dot_dimension_numbers<[1], [0], [0], [1], [0, 0, 1, 1], [], []>} : vector<64x32xbf16>, vector<32x128xbf16>, vector<64x128xf32> -> vector<64x128xf32>
    %250 = vector.broadcast %246 : vector<1x128xf32> to vector<64x128xf32>
    %251 = arith.addf %249, %250 : vector<64x128xf32>
    %252 = vector.shape_cast %251 : vector<64x128xf32> to vector<8x8x128xf32>
    %c0_87 = arith.constant 0 : index
    %c0_88 = arith.constant 0 : index
    %c0_89 = arith.constant 0 : index
    %253 = vector.load %arg10[%c0_87, %c0_88, %c0_89] : memref<8x8x128xf32, #tpu.memory_space<vmem>>, vector<8x8x128xf32>
    tpu.vector_store %arg10[%c0_87, %c0_88, %c0_89], %252 {strides = array<i32>} : memref<8x8x128xf32, #tpu.memory_space<vmem>>, vector<8x8x128xf32>,
    %cst_90 = arith.constant 0.000000e+00 : f32
    %254 = vector.broadcast %cst_90 : f32 to vector<8x32xf32>
    %cst_91 = arith.constant 0.000000e+00 : f32
    %255 = vector.broadcast %cst_91 : f32 to vector<8x32xf32>
    %c0_i32_92 = arith.constant 0 : i32
    %256 = arith.index_cast %c0_i32_92 : i32 to index
    %c0_93 = arith.constant 0 : index
    %c0_94 = arith.constant 0 : index
    %257 = vector.load %arg10[%256, %c0_93, %c0_94] : memref<8x8x128xf32, #tpu.memory_space<vmem>>, vector<1x8x128xf32>
    %258 = vector.shape_cast %257 : vector<1x8x128xf32> to vector<8x128xf32>
    %259 = arith.truncf %254 : vector<8x32xf32> to vector<8x32xbf16>
    %cst_95 = arith.constant dense<0.000000e+00> : vector<8x128xf32>
    %260 = tpu.matmul %259, %245, %cst_95 {dimension_numbers = #tpu.dot_dimension_numbers<[1], [0], [0], [1], [0, 0, 1, 1], [], []>} : vector<8x32xbf16>, vector<32x128xbf16>, vector<8x128xf32> -> vector<8x128xf32>
    %261 = arith.addf %258, %260 : vector<8x128xf32>
    %262 = arith.negf %261 : vector<8x128xf32>
    %263 = math.exp %262 : vector<8x128xf32>
    %cst_96 = arith.constant 1.000000e+00 : f32
    %264 = vector.broadcast %cst_96 : f32 to vector<8x128xf32>
    %265 = arith.addf %264, %263 : vector<8x128xf32>
    %266 = arith.divf %264, %265 : vector<8x128xf32>
    %267 = vector.extract_strided_slice %266 {offsets = [0, 0], sizes = [8, 32], strides = [1, 1]} : vector<8x128xf32> to vector<8x32xf32>
    %268 = vector.extract_strided_slice %266 {offsets = [0, 32], sizes = [8, 32], strides = [1, 1]} : vector<8x128xf32> to vector<8x32xf32>
    %269 = vector.extract_strided_slice %266 {offsets = [0, 64], sizes = [8, 32], strides = [1, 1]} : vector<8x128xf32> to vector<8x32xf32>
    %cst_97 = arith.constant 2.000000e+00 : f32
    %270 = vector.broadcast %cst_97 : f32 to vector<8x32xf32>
    %271 = arith.mulf %270, %269 : vector<8x32xf32>
    %cst_98 = arith.constant 1.000000e+00 : f32
    %272 = vector.broadcast %cst_98 : f32 to vector<8x32xf32>
    %273 = arith.subf %271, %272 : vector<8x32xf32>
    %274 = vector.extract_strided_slice %266 {offsets = [0, 96], sizes = [8, 32], strides = [1, 1]} : vector<8x128xf32> to vector<8x32xf32>
    %275 = arith.mulf %268, %255 : vector<8x32xf32>
    %276 = arith.mulf %267, %273 : vector<8x32xf32>
    %277 = arith.addf %275, %276 : vector<8x32xf32>
    %278 = math.tanh %277 : vector<8x32xf32>
    %279 = arith.mulf %274, %278 : vector<8x32xf32>
    %c1_i32_99 = arith.constant 1 : i32
    %280 = arith.index_cast %c1_i32_99 : i32 to index
    %c0_100 = arith.constant 0 : index
    %c0_101 = arith.constant 0 : index
    %281 = vector.load %arg10[%280, %c0_100, %c0_101] : memref<8x8x128xf32, #tpu.memory_space<vmem>>, vector<1x8x128xf32>
    %282 = vector.shape_cast %281 : vector<1x8x128xf32> to vector<8x128xf32>
    %283 = arith.truncf %279 : vector<8x32xf32> to vector<8x32xbf16>
    %cst_102 = arith.constant dense<0.000000e+00> : vector<8x128xf32>
    %284 = tpu.matmul %283, %245, %cst_102 {dimension_numbers = #tpu.dot_dimension_numbers<[1], [0], [0], [1], [0, 0, 1, 1], [], []>} : vector<8x32xbf16>, vector<32x128xbf16>, vector<8x128xf32> -> vector<8x128xf32>
    %285 = arith.addf %282, %284 : vector<8x128xf32>
    %286 = arith.negf %285 : vector<8x128xf32>
    %287 = math.exp %286 : vector<8x128xf32>
    %cst_103 = arith.constant 1.000000e+00 : f32
    %288 = vector.broadcast %cst_103 : f32 to vector<8x128xf32>
    %289 = arith.addf %288, %287 : vector<8x128xf32>
    %290 = arith.divf %288, %289 : vector<8x128xf32>
    %291 = vector.extract_strided_slice %290 {offsets = [0, 0], sizes = [8, 32], strides = [1, 1]} : vector<8x128xf32> to vector<8x32xf32>
    %292 = vector.extract_strided_slice %290 {offsets = [0, 32], sizes = [8, 32], strides = [1, 1]} : vector<8x128xf32> to vector<8x32xf32>
    %293 = vector.extract_strided_slice %290 {offsets = [0, 64], sizes = [8, 32], strides = [1, 1]} : vector<8x128xf32> to vector<8x32xf32>
    %cst_104 = arith.constant 2.000000e+00 : f32
    %294 = vector.broadcast %cst_104 : f32 to vector<8x32xf32>
    %295 = arith.mulf %294, %293 : vector<8x32xf32>
    %cst_105 = arith.constant 1.000000e+00 : f32
    %296 = vector.broadcast %cst_105 : f32 to vector<8x32xf32>
    %297 = arith.subf %295, %296 : vector<8x32xf32>
    %298 = vector.extract_strided_slice %290 {offsets = [0, 96], sizes = [8, 32], strides = [1, 1]} : vector<8x128xf32> to vector<8x32xf32>
    %299 = arith.mulf %292, %277 : vector<8x32xf32>
    %300 = arith.mulf %291, %297 : vector<8x32xf32>
    %301 = arith.addf %299, %300 : vector<8x32xf32>
    %302 = math.tanh %301 : vector<8x32xf32>
    %303 = arith.mulf %298, %302 : vector<8x32xf32>
    %c2_i32_106 = arith.constant 2 : i32
    %304 = arith.index_cast %c2_i32_106 : i32 to index
    %c0_107 = arith.constant 0 : index
    %c0_108 = arith.constant 0 : index
    %305 = vector.load %arg10[%304, %c0_107, %c0_108] : memref<8x8x128xf32, #tpu.memory_space<vmem>>, vector<1x8x128xf32>
    %306 = vector.shape_cast %305 : vector<1x8x128xf32> to vector<8x128xf32>
    %307 = arith.truncf %303 : vector<8x32xf32> to vector<8x32xbf16>
    %cst_109 = arith.constant dense<0.000000e+00> : vector<8x128xf32>
    %308 = tpu.matmul %307, %245, %cst_109 {dimension_numbers = #tpu.dot_dimension_numbers<[1], [0], [0], [1], [0, 0, 1, 1], [], []>} : vector<8x32xbf16>, vector<32x128xbf16>, vector<8x128xf32> -> vector<8x128xf32>
    %309 = arith.addf %306, %308 : vector<8x128xf32>
    %310 = arith.negf %309 : vector<8x128xf32>
    %311 = math.exp %310 : vector<8x128xf32>
    %cst_110 = arith.constant 1.000000e+00 : f32
    %312 = vector.broadcast %cst_110 : f32 to vector<8x128xf32>
    %313 = arith.addf %312, %311 : vector<8x128xf32>
    %314 = arith.divf %312, %313 : vector<8x128xf32>
    %315 = vector.extract_strided_slice %314 {offsets = [0, 0], sizes = [8, 32], strides = [1, 1]} : vector<8x128xf32> to vector<8x32xf32>
    %316 = vector.extract_strided_slice %314 {offsets = [0, 32], sizes = [8, 32], strides = [1, 1]} : vector<8x128xf32> to vector<8x32xf32>
    %317 = vector.extract_strided_slice %314 {offsets = [0, 64], sizes = [8, 32], strides = [1, 1]} : vector<8x128xf32> to vector<8x32xf32>
    %cst_111 = arith.constant 2.000000e+00 : f32
    %318 = vector.broadcast %cst_111 : f32 to vector<8x32xf32>
    %319 = arith.mulf %318, %317 : vector<8x32xf32>
    %cst_112 = arith.constant 1.000000e+00 : f32
    %320 = vector.broadcast %cst_112 : f32 to vector<8x32xf32>
    %321 = arith.subf %319, %320 : vector<8x32xf32>
    %322 = vector.extract_strided_slice %314 {offsets = [0, 96], sizes = [8, 32], strides = [1, 1]} : vector<8x128xf32> to vector<8x32xf32>
    %323 = arith.mulf %316, %301 : vector<8x32xf32>
    %324 = arith.mulf %315, %321 : vector<8x32xf32>
    %325 = arith.addf %323, %324 : vector<8x32xf32>
    %326 = math.tanh %325 : vector<8x32xf32>
    %327 = arith.mulf %322, %326 : vector<8x32xf32>
    %c3_i32_113 = arith.constant 3 : i32
    %328 = arith.index_cast %c3_i32_113 : i32 to index
    %c0_114 = arith.constant 0 : index
    %c0_115 = arith.constant 0 : index
    %329 = vector.load %arg10[%328, %c0_114, %c0_115] : memref<8x8x128xf32, #tpu.memory_space<vmem>>, vector<1x8x128xf32>
    %330 = vector.shape_cast %329 : vector<1x8x128xf32> to vector<8x128xf32>
    %331 = arith.truncf %327 : vector<8x32xf32> to vector<8x32xbf16>
    %cst_116 = arith.constant dense<0.000000e+00> : vector<8x128xf32>
    %332 = tpu.matmul %331, %245, %cst_116 {dimension_numbers = #tpu.dot_dimension_numbers<[1], [0], [0], [1], [0, 0, 1, 1], [], []>} : vector<8x32xbf16>, vector<32x128xbf16>, vector<8x128xf32> -> vector<8x128xf32>
    %333 = arith.addf %330, %332 : vector<8x128xf32>
    %334 = arith.negf %333 : vector<8x128xf32>
    %335 = math.exp %334 : vector<8x128xf32>
    %cst_117 = arith.constant 1.000000e+00 : f32
    %336 = vector.broadcast %cst_117 : f32 to vector<8x128xf32>
    %337 = arith.addf %336, %335 : vector<8x128xf32>
    %338 = arith.divf %336, %337 : vector<8x128xf32>
    %339 = vector.extract_strided_slice %338 {offsets = [0, 0], sizes = [8, 32], strides = [1, 1]} : vector<8x128xf32> to vector<8x32xf32>
    %340 = vector.extract_strided_slice %338 {offsets = [0, 32], sizes = [8, 32], strides = [1, 1]} : vector<8x128xf32> to vector<8x32xf32>
    %341 = vector.extract_strided_slice %338 {offsets = [0, 64], sizes = [8, 32], strides = [1, 1]} : vector<8x128xf32> to vector<8x32xf32>
    %cst_118 = arith.constant 2.000000e+00 : f32
    %342 = vector.broadcast %cst_118 : f32 to vector<8x32xf32>
    %343 = arith.mulf %342, %341 : vector<8x32xf32>
    %cst_119 = arith.constant 1.000000e+00 : f32
    %344 = vector.broadcast %cst_119 : f32 to vector<8x32xf32>
    %345 = arith.subf %343, %344 : vector<8x32xf32>
    %346 = vector.extract_strided_slice %338 {offsets = [0, 96], sizes = [8, 32], strides = [1, 1]} : vector<8x128xf32> to vector<8x32xf32>
    %347 = arith.mulf %340, %325 : vector<8x32xf32>
    %348 = arith.mulf %339, %345 : vector<8x32xf32>
    %349 = arith.addf %347, %348 : vector<8x32xf32>
    %350 = math.tanh %349 : vector<8x32xf32>
    %351 = arith.mulf %346, %350 : vector<8x32xf32>
    %c4_i32_120 = arith.constant 4 : i32
    %352 = arith.index_cast %c4_i32_120 : i32 to index
    %c0_121 = arith.constant 0 : index
    %c0_122 = arith.constant 0 : index
    %353 = vector.load %arg10[%352, %c0_121, %c0_122] : memref<8x8x128xf32, #tpu.memory_space<vmem>>, vector<1x8x128xf32>
    %354 = vector.shape_cast %353 : vector<1x8x128xf32> to vector<8x128xf32>
    %355 = arith.truncf %351 : vector<8x32xf32> to vector<8x32xbf16>
    %cst_123 = arith.constant dense<0.000000e+00> : vector<8x128xf32>
    %356 = tpu.matmul %355, %245, %cst_123 {dimension_numbers = #tpu.dot_dimension_numbers<[1], [0], [0], [1], [0, 0, 1, 1], [], []>} : vector<8x32xbf16>, vector<32x128xbf16>, vector<8x128xf32> -> vector<8x128xf32>
    %357 = arith.addf %354, %356 : vector<8x128xf32>
    %358 = arith.negf %357 : vector<8x128xf32>
    %359 = math.exp %358 : vector<8x128xf32>
    %cst_124 = arith.constant 1.000000e+00 : f32
    %360 = vector.broadcast %cst_124 : f32 to vector<8x128xf32>
    %361 = arith.addf %360, %359 : vector<8x128xf32>
    %362 = arith.divf %360, %361 : vector<8x128xf32>
    %363 = vector.extract_strided_slice %362 {offsets = [0, 0], sizes = [8, 32], strides = [1, 1]} : vector<8x128xf32> to vector<8x32xf32>
    %364 = vector.extract_strided_slice %362 {offsets = [0, 32], sizes = [8, 32], strides = [1, 1]} : vector<8x128xf32> to vector<8x32xf32>
    %365 = vector.extract_strided_slice %362 {offsets = [0, 64], sizes = [8, 32], strides = [1, 1]} : vector<8x128xf32> to vector<8x32xf32>
    %cst_125 = arith.constant 2.000000e+00 : f32
    %366 = vector.broadcast %cst_125 : f32 to vector<8x32xf32>
    %367 = arith.mulf %366, %365 : vector<8x32xf32>
    %cst_126 = arith.constant 1.000000e+00 : f32
    %368 = vector.broadcast %cst_126 : f32 to vector<8x32xf32>
    %369 = arith.subf %367, %368 : vector<8x32xf32>
    %370 = vector.extract_strided_slice %362 {offsets = [0, 96], sizes = [8, 32], strides = [1, 1]} : vector<8x128xf32> to vector<8x32xf32>
    %371 = arith.mulf %364, %349 : vector<8x32xf32>
    %372 = arith.mulf %363, %369 : vector<8x32xf32>
    %373 = arith.addf %371, %372 : vector<8x32xf32>
    %374 = math.tanh %373 : vector<8x32xf32>
    %375 = arith.mulf %370, %374 : vector<8x32xf32>
    %c5_i32_127 = arith.constant 5 : i32
    %376 = arith.index_cast %c5_i32_127 : i32 to index
    %c0_128 = arith.constant 0 : index
    %c0_129 = arith.constant 0 : index
    %377 = vector.load %arg10[%376, %c0_128, %c0_129] : memref<8x8x128xf32, #tpu.memory_space<vmem>>, vector<1x8x128xf32>
    %378 = vector.shape_cast %377 : vector<1x8x128xf32> to vector<8x128xf32>
    %379 = arith.truncf %375 : vector<8x32xf32> to vector<8x32xbf16>
    %cst_130 = arith.constant dense<0.000000e+00> : vector<8x128xf32>
    %380 = tpu.matmul %379, %245, %cst_130 {dimension_numbers = #tpu.dot_dimension_numbers<[1], [0], [0], [1], [0, 0, 1, 1], [], []>} : vector<8x32xbf16>, vector<32x128xbf16>, vector<8x128xf32> -> vector<8x128xf32>
    %381 = arith.addf %378, %380 : vector<8x128xf32>
    %382 = arith.negf %381 : vector<8x128xf32>
    %383 = math.exp %382 : vector<8x128xf32>
    %cst_131 = arith.constant 1.000000e+00 : f32
    %384 = vector.broadcast %cst_131 : f32 to vector<8x128xf32>
    %385 = arith.addf %384, %383 : vector<8x128xf32>
    %386 = arith.divf %384, %385 : vector<8x128xf32>
    %387 = vector.extract_strided_slice %386 {offsets = [0, 0], sizes = [8, 32], strides = [1, 1]} : vector<8x128xf32> to vector<8x32xf32>
    %388 = vector.extract_strided_slice %386 {offsets = [0, 32], sizes = [8, 32], strides = [1, 1]} : vector<8x128xf32> to vector<8x32xf32>
    %389 = vector.extract_strided_slice %386 {offsets = [0, 64], sizes = [8, 32], strides = [1, 1]} : vector<8x128xf32> to vector<8x32xf32>
    %cst_132 = arith.constant 2.000000e+00 : f32
    %390 = vector.broadcast %cst_132 : f32 to vector<8x32xf32>
    %391 = arith.mulf %390, %389 : vector<8x32xf32>
    %cst_133 = arith.constant 1.000000e+00 : f32
    %392 = vector.broadcast %cst_133 : f32 to vector<8x32xf32>
    %393 = arith.subf %391, %392 : vector<8x32xf32>
    %394 = vector.extract_strided_slice %386 {offsets = [0, 96], sizes = [8, 32], strides = [1, 1]} : vector<8x128xf32> to vector<8x32xf32>
    %395 = arith.mulf %388, %373 : vector<8x32xf32>
    %396 = arith.mulf %387, %393 : vector<8x32xf32>
    %397 = arith.addf %395, %396 : vector<8x32xf32>
    %398 = math.tanh %397 : vector<8x32xf32>
    %399 = arith.mulf %394, %398 : vector<8x32xf32>
    %c6_i32_134 = arith.constant 6 : i32
    %400 = arith.index_cast %c6_i32_134 : i32 to index
    %c0_135 = arith.constant 0 : index
    %c0_136 = arith.constant 0 : index
    %401 = vector.load %arg10[%400, %c0_135, %c0_136] : memref<8x8x128xf32, #tpu.memory_space<vmem>>, vector<1x8x128xf32>
    %402 = vector.shape_cast %401 : vector<1x8x128xf32> to vector<8x128xf32>
    %403 = arith.truncf %399 : vector<8x32xf32> to vector<8x32xbf16>
    %cst_137 = arith.constant dense<0.000000e+00> : vector<8x128xf32>
    %404 = tpu.matmul %403, %245, %cst_137 {dimension_numbers = #tpu.dot_dimension_numbers<[1], [0], [0], [1], [0, 0, 1, 1], [], []>} : vector<8x32xbf16>, vector<32x128xbf16>, vector<8x128xf32> -> vector<8x128xf32>
    %405 = arith.addf %402, %404 : vector<8x128xf32>
    %406 = arith.negf %405 : vector<8x128xf32>
    %407 = math.exp %406 : vector<8x128xf32>
    %cst_138 = arith.constant 1.000000e+00 : f32
    %408 = vector.broadcast %cst_138 : f32 to vector<8x128xf32>
    %409 = arith.addf %408, %407 : vector<8x128xf32>
    %410 = arith.divf %408, %409 : vector<8x128xf32>
    %411 = vector.extract_strided_slice %410 {offsets = [0, 0], sizes = [8, 32], strides = [1, 1]} : vector<8x128xf32> to vector<8x32xf32>
    %412 = vector.extract_strided_slice %410 {offsets = [0, 32], sizes = [8, 32], strides = [1, 1]} : vector<8x128xf32> to vector<8x32xf32>
    %413 = vector.extract_strided_slice %410 {offsets = [0, 64], sizes = [8, 32], strides = [1, 1]} : vector<8x128xf32> to vector<8x32xf32>
    %cst_139 = arith.constant 2.000000e+00 : f32
    %414 = vector.broadcast %cst_139 : f32 to vector<8x32xf32>
    %415 = arith.mulf %414, %413 : vector<8x32xf32>
    %cst_140 = arith.constant 1.000000e+00 : f32
    %416 = vector.broadcast %cst_140 : f32 to vector<8x32xf32>
    %417 = arith.subf %415, %416 : vector<8x32xf32>
    %418 = vector.extract_strided_slice %410 {offsets = [0, 96], sizes = [8, 32], strides = [1, 1]} : vector<8x128xf32> to vector<8x32xf32>
    %419 = arith.mulf %412, %397 : vector<8x32xf32>
    %420 = arith.mulf %411, %417 : vector<8x32xf32>
    %421 = arith.addf %419, %420 : vector<8x32xf32>
    %422 = math.tanh %421 : vector<8x32xf32>
    %423 = arith.mulf %418, %422 : vector<8x32xf32>
    %c7_i32_141 = arith.constant 7 : i32
    %424 = arith.index_cast %c7_i32_141 : i32 to index
    %c0_142 = arith.constant 0 : index
    %c0_143 = arith.constant 0 : index
    %425 = vector.load %arg10[%424, %c0_142, %c0_143] : memref<8x8x128xf32, #tpu.memory_space<vmem>>, vector<1x8x128xf32>
    %426 = vector.shape_cast %425 : vector<1x8x128xf32> to vector<8x128xf32>
    %427 = arith.truncf %423 : vector<8x32xf32> to vector<8x32xbf16>
    %cst_144 = arith.constant dense<0.000000e+00> : vector<8x128xf32>
    %428 = tpu.matmul %427, %245, %cst_144 {dimension_numbers = #tpu.dot_dimension_numbers<[1], [0], [0], [1], [0, 0, 1, 1], [], []>} : vector<8x32xbf16>, vector<32x128xbf16>, vector<8x128xf32> -> vector<8x128xf32>
    %429 = arith.addf %426, %428 : vector<8x128xf32>
    %430 = arith.negf %429 : vector<8x128xf32>
    %431 = math.exp %430 : vector<8x128xf32>
    %cst_145 = arith.constant 1.000000e+00 : f32
    %432 = vector.broadcast %cst_145 : f32 to vector<8x128xf32>
    %433 = arith.addf %432, %431 : vector<8x128xf32>
    %434 = arith.divf %432, %433 : vector<8x128xf32>
    %435 = vector.extract_strided_slice %434 {offsets = [0, 0], sizes = [8, 32], strides = [1, 1]} : vector<8x128xf32> to vector<8x32xf32>
    %436 = vector.extract_strided_slice %434 {offsets = [0, 32], sizes = [8, 32], strides = [1, 1]} : vector<8x128xf32> to vector<8x32xf32>
    %437 = vector.extract_strided_slice %434 {offsets = [0, 64], sizes = [8, 32], strides = [1, 1]} : vector<8x128xf32> to vector<8x32xf32>
    %cst_146 = arith.constant 2.000000e+00 : f32
    %438 = vector.broadcast %cst_146 : f32 to vector<8x32xf32>
    %439 = arith.mulf %438, %437 : vector<8x32xf32>
    %cst_147 = arith.constant 1.000000e+00 : f32
    %440 = vector.broadcast %cst_147 : f32 to vector<8x32xf32>
    %441 = arith.subf %439, %440 : vector<8x32xf32>
    %442 = vector.extract_strided_slice %434 {offsets = [0, 96], sizes = [8, 32], strides = [1, 1]} : vector<8x128xf32> to vector<8x32xf32>
    %443 = arith.mulf %436, %421 : vector<8x32xf32>
    %444 = arith.mulf %435, %441 : vector<8x32xf32>
    %445 = arith.addf %443, %444 : vector<8x32xf32>
    %446 = math.tanh %445 : vector<8x32xf32>
    %447 = arith.mulf %442, %446 : vector<8x32xf32>
    %c8_i32_148 = arith.constant 8 : i32
    %c0_149 = arith.constant 0 : index
    %c0_150 = arith.constant 0 : index
    %448 = vector.load %arg7[%c0_149, %c0_150] : memref<32x4xf32, #tpu.memory_space<vmem>>, vector<32x4xf32>
    %cst_151 = arith.constant dense<0.000000e+00> : vector<8x4xf32>
    %449 = tpu.matmul %447, %448, %cst_151 {dimension_numbers = #tpu.dot_dimension_numbers<[1], [0], [0], [1], [0, 0, 1, 1], [], []>} : vector<8x32xf32>, vector<32x4xf32>, vector<8x4xf32> -> vector<8x4xf32>
    %c0_152 = arith.constant 0 : index
    %c0_153 = arith.constant 0 : index
    %450 = vector.load %arg8[%c0_152, %c0_153] : memref<1x4xf32, #tpu.memory_space<vmem>>, vector<1x4xf32>
    %451 = vector.broadcast %450 : vector<1x4xf32> to vector<8x4xf32>
    %452 = arith.addf %449, %451 : vector<8x4xf32>
    %c0_154 = arith.constant 0 : index
    %c0_155 = arith.constant 0 : index
    %453 = vector.load %arg9[%c0_154, %c0_155] : memref<8x4xf32, #tpu.memory_space<vmem>>, vector<8x4xf32>
    tpu.vector_store %arg9[%c0_154, %c0_155], %452 {strides = array<i32>} : memref<8x4xf32, #tpu.memory_space<vmem>>, vector<8x4xf32>,
    return
  }
}

</mosaic_0001>

<llo_original>
// kernel: tpu_custom_call.1
$region0: #{tpu_custom_call.1}
  #allocation0 [shape = 'u32[]', space=smem, size = 0x4, offset = 0x4, fixed_abs, tag = 'smem constant byte address 0x4 - core index']
  #allocation1 [shape = 'u32[144,128]{1,0:T(1,128)}', space=vmem, size = 0x12000, scoped, tag = 'internal scratch']
  #allocation2 [shape = 'f32[8,8,128]{2,1,0:T(8,128)}', space=vmem, size = 0x8000, scoped, tag = 'scratch operand']
  #allocation3 [shape = 'bf16[8,8,32]{2,1,0:T(8,128)(2,1)}', space=vmem, size = 0x4000, scoped, tag = 'scratch operand']
  %s0 = inlined_call_operand.vmem [shape: bf16[8,8,16], index: 0, kind: input, shape index: {}]
  %s1 = inlined_call_operand.hbm [shape: bf16[16,128], index: 1, kind: input, shape index: {}]
  %s2 = inlined_call_operand.hbm [shape: bf16[32,128], index: 2, kind: input, shape index: {}]
  %s3 = inlined_call_operand.vmem [shape: f32[1,128], index: 3, kind: input, shape index: {}]
  %s4 = inlined_call_operand.hbm [shape: bf16[32,128], index: 4, kind: input, shape index: {}]
  %s5 = inlined_call_operand.hbm [shape: bf16[32,128], index: 5, kind: input, shape index: {}]
  %s6 = inlined_call_operand.vmem [shape: f32[1,128], index: 6, kind: input, shape index: {}]
  %s7 = inlined_call_operand.vmem [shape: f32[32,4], index: 7, kind: input, shape index: {}]
  %s8 = inlined_call_operand.vmem [shape: f32[1,4], index: 8, kind: input, shape index: {}]
  %s9 = inlined_call_operand.vmem [shape: f32[8,4], index: 9, kind: output, shape index: {}]
  %s10 = sld [smem:[#allocation0]]
  $region62: #{tpu_custom_call.1} parent=0
    _
  %s12 = ssub.s32 1, %s10
  %s13 = scalar_select 0, %s12, %s10
  $region1: #{tpu_custom_call.1} parent=0
    #allocation4 [shape = 'u8[4096]{0}', space=vmem, size = 0x1000, scoped, tag = 'input window, operand 1, single buffered']
    #allocation5 [shape = 's32[1]{0}', space=sflag, size = 0x4, scoped, tag = 'scoped memory for tpu_custom_call.1']
    #allocation6 [shape = 'u8[8192]{0}', space=vmem, size = 0x2000, scoped, tag = 'input window, operand 2, single buffered']
    #allocation7 [shape = 's32[1]{0}', space=sflag, size = 0x4, scoped, tag = 'scoped memory for tpu_custom_call.1']
    #allocation8 [shape = 'u8[8192]{0}', space=vmem, size = 0x2000, scoped, tag = 'input window, operand 4, single buffered']
    #allocation9 [shape = 'u8[8192]{0}', space=vmem, size = 0x2000, scoped, tag = 'input window, operand 5, single buffered']
    #allocation10 [shape = 's32[1]{0}', space=sflag, size = 0x4, scoped, tag = 'scoped memory for tpu_custom_call.1']
    %14 = vsyncpa [#allocation5], 0
    %15 = vsyncpa [#allocation7], 0
    %16 = vsyncpa [#allocation10], 0
    // Predicated region
    $region2: #{tpu_custom_call.1} parent=1 // pred_check
      _
    $region3: #{tpu_custom_call.1} parent=1 // pred_check_branch
      %18 = sbr.rel (0) target = $region5
    $region4: #{tpu_custom_call.1} parent=1 // pred_region
      _
    $region5: #{tpu_custom_call.1} parent=1 // pred_fallthru
      _
    // Predicated region
    $region6: #{tpu_custom_call.1} parent=1 // pred_check
      _
    $region7: #{tpu_custom_call.1} parent=1 // pred_check_branch
      %20 = sbr.rel (0) target = $region9
    $region8: #{tpu_custom_call.1} parent=1 // pred_region
      %s22 = ssub.s32 128, 128
      %23 = vsyncadd [#allocation5], %s22
      %s24 = sshll.u32 [#allocation4], 4
      %s25 = int_to_ptr.vmem [resolvable:$true] %s24
      %30 = dma.hbm_to_vmem [thread:$0]  %s1, 128, %s25, [#allocation5], 64, 64, 4
    $region9: #{tpu_custom_call.1} parent=1 // pred_fallthru
      _
    // Predicated region
    $region10: #{tpu_custom_call.1} parent=1 // pred_check
      _
    $region11: #{tpu_custom_call.1} parent=1 // pred_check_branch
      %32 = sbr.rel (0) target = $region13
    $region12: #{tpu_custom_call.1} parent=1 // pred_region
      %s34 = ssub.s32 256, 256
      %35 = vsyncadd [#allocation7], %s34
      %s36 = sshll.u32 [#allocation6], 4
      %s37 = int_to_ptr.vmem [resolvable:$true] %s36
      %42 = dma.hbm_to_vmem [thread:$0]  %s2, 256, %s37, [#allocation7], 64, 64, 4
    $region13: #{tpu_custom_call.1} parent=1 // pred_fallthru
      _
    // Predicated region
    $region14: #{tpu_custom_call.1} parent=1 // pred_check
      _
    $region15: #{tpu_custom_call.1} parent=1 // pred_check_branch
      %44 = sbr.rel (0) target = $region17
    $region16: #{tpu_custom_call.1} parent=1 // pred_region
      _
    $region17: #{tpu_custom_call.1} parent=1 // pred_fallthru
      _
    // Predicated region
    $region18: #{tpu_custom_call.1} parent=1 // pred_check
      _
    $region19: #{tpu_custom_call.1} parent=1 // pred_check_branch
      %46 = sbr.rel (0) target = $region21
    $region20: #{tpu_custom_call.1} parent=1 // pred_region
      %s48 = ssub.s32 256, 256
      %49 = vsyncadd [#allocation7], %s48
      %s50 = sshll.u32 [#allocation8], 4
      %s51 = int_to_ptr.vmem [resolvable:$true] %s50
      %56 = dma.hbm_to_vmem [thread:$0]  %s4, 256, %s51, [#allocation7], 64, 64, 4
    $region21: #{tpu_custom_call.1} parent=1 // pred_fallthru
      _
    // Predicated region
    $region22: #{tpu_custom_call.1} parent=1 // pred_check
      _
    $region23: #{tpu_custom_call.1} parent=1 // pred_check_branch
      %58 = sbr.rel (0) target = $region25
    $region24: #{tpu_custom_call.1} parent=1 // pred_region
      %s60 = ssub.s32 256, 256
      %61 = vsyncadd [#allocation10], %s60
      %s62 = sshll.u32 [#allocation9], 4
      %s63 = int_to_ptr.vmem [resolvable:$true] %s62
      %68 = dma.hbm_to_vmem [thread:$0]  %s5, 256, %s63, [#allocation10], 64, 64, 4
    $region25: #{tpu_custom_call.1} parent=1 // pred_fallthru
      _
    // Predicated region
    $region26: #{tpu_custom_call.1} parent=1 // pred_check
      _
    $region27: #{tpu_custom_call.1} parent=1 // pred_check_branch
      %70 = sbr.rel (0) target = $region29
    $region28: #{tpu_custom_call.1} parent=1 // pred_region
      _
    $region29: #{tpu_custom_call.1} parent=1 // pred_fallthru
      _
    // Predicated region
    $region30: #{tpu_custom_call.1} parent=1 // pred_check
      _
    $region31: #{tpu_custom_call.1} parent=1 // pred_check_branch
      %72 = sbr.rel (0) target = $region33
    $region32: #{tpu_custom_call.1} parent=1 // pred_region
      _
    $region33: #{tpu_custom_call.1} parent=1 // pred_fallthru
      _
    // Predicated region
    $region34: #{tpu_custom_call.1} parent=1 // pred_check
      _
    $region35: #{tpu_custom_call.1} parent=1 // pred_check_branch
      %74 = sbr.rel (0) target = $region37
    $region36: #{tpu_custom_call.1} parent=1 // pred_region
      _
    $region37: #{tpu_custom_call.1} parent=1 // pred_fallthru
      _
    // Predicated region
    $region38: #{tpu_custom_call.1} parent=1 // pred_check
      _
    $region39: #{tpu_custom_call.1} parent=1 // pred_check_branch
      %76 = sbr.rel (0) target = $region41
    $region40: #{tpu_custom_call.1} parent=1 // pred_region
      %77 = dma.done [#allocation5], 128
    $region41: #{tpu_custom_call.1} parent=1 // pred_fallthru
      _
    // Predicated region
    $region42: #{tpu_custom_call.1} parent=1 // pred_check
      _
    $region43: #{tpu_custom_call.1} parent=1 // pred_check_branch
      %79 = sbr.rel (0) target = $region45
    $region44: #{tpu_custom_call.1} parent=1 // pred_region
      %80 = dma.done [#allocation7], 256
    $region45: #{tpu_custom_call.1} parent=1 // pred_fallthru
      _
    // Predicated region
    $region46: #{tpu_custom_call.1} parent=1 // pred_check
      _
    $region47: #{tpu_custom_call.1} parent=1 // pred_check_branch
      %82 = sbr.rel (0) target = $region49
    $region48: #{tpu_custom_call.1} parent=1 // pred_region
      %83 = dma.done [#allocation7], 256
    $region49: #{tpu_custom_call.1} parent=1 // pred_fallthru
      _
    // Predicated region
    $region50: #{tpu_custom_call.1} parent=1 // pred_check
      _
    $region51: #{tpu_custom_call.1} parent=1 // pred_check_branch
      %85 = sbr.rel (0) target = $region53
    $region52: #{tpu_custom_call.1} parent=1 // pred_region
      %86 = dma.done [#allocation10], 256
    $region53: #{tpu_custom_call.1} parent=1 // pred_fallthru
      _
    %v88 = vld [vmem:[#allocation4] sm:$0xf]
    %v89 = vld [vmem:[#allocation4 + $0x4] sm:$0xf]
    %v90 = vld [vmem:[#allocation6] sm:$0xf]
    %v91 = vld [vmem:[#allocation6 + $0x4] sm:$0xf]
    %v92 = vld [vmem:[#allocation6 + $0x8] sm:$0xf]
    %v93 = vld [vmem:[#allocation6 + $0xc] sm:$0xf]
    %v94 = vld [vmem:[%s3] sm:$0x1]
    %v95 = vld [vmem:[%s0] sm:$0xf]
    %v96 = vld [vmem:[%s0 + $0x4] sm:$0xf]
    %v97 = vld [vmem:[%s0 + $0x8] sm:$0xf]
    %v98 = vld [vmem:[%s0 + $0xc] sm:$0xf]
    %v99 = vld [vmem:[%s0 + $0x10] sm:$0xf]
    %v100 = vld [vmem:[%s0 + $0x14] sm:$0xf]
    %v101 = vld [vmem:[%s0 + $0x18] sm:$0xf]
    %v102 = vld [vmem:[%s0 + $0x1c] sm:$0xf]
    %v104 = vlaneseq
    %v105 = vshrl.u32 %v104, 7
    %v106 = vsub.s32 0, %v105
    %v107 = vrot.slane %v94, %v106
    %v117 = vunpack.c.l.b16 %v95
    %v118 = vunpack.c.l.b16 %v96
    %v119 = vunpack.c.l.b16 %v97
    %v120 = vunpack.c.l.b16 %v98
    %v121 = vunpack.c.l.b16 %v99
    %v122 = vunpack.c.l.b16 %v100
    %v123 = vunpack.c.l.b16 %v101
    %v124 = vunpack.c.l.b16 %v102
    %v125 = vpack.c.b16 %v118, %v117
    %v126 = vpack.c.b16 %v120, %v119
    %v127 = vpack.c.b16 %v122, %v121
    %v128 = vpack.c.b16 %v124, %v123
    %v131 = vunpack.c.l.b16 %v88
    %v132 = vunpack.c.l.b16 %v89
    %v133 = vpack.c.b16 %v132, %v131
    %vm135 = vcmask 130048
    %v137 = vsel %vm135, %v125, 0
    %v140 = vsel %vm135, %v126, 0
    %v143 = vsel %vm135, %v127, 0
    %v146 = vsel %vm135, %v128, 0
    %148 = vmatprep.subr.bf16.mxu0 0
    %149 = vmatpush1.bf16.msra.mxu0 0
    %150 = vmatprep.subr.bf16.mxu0 0
    %151 = vmatpush1.bf16.msra.mxu0 0
    %152 = vmatprep.subr.bf16.mxu0 0
    %153 = vmatpush1.bf16.msra.mxu0 0
    %154 = vmatprep.subr.bf16.mxu0 0
    %155 = vmatpush1.bf16.msra.mxu0 0
    %156 = vmatprep.subr.bf16.mxu0 0
    %157 = vmatpush1.bf16.msra.mxu0 0
    %158 = vmatprep.subr.bf16.mxu0 0
    %159 = vmatpush1.bf16.msra.mxu0 0
    %160 = vmatprep.subr.bf16.mxu0 0
    %161 = vmatpush1.bf16.msra.mxu0 0
    %162 = vmatprep.subr.bf16.mxu0 0
    %163 = vmatpush1.bf16.msra.mxu0 %v133
    %164 = vmatprep.subr.bf16.mxu0 0
    %165 = vmatpush2.bf16.msra.mxu0 0
    %166 = vmatprep.subr.bf16.mxu0 0
    %167 = vmatpush2.bf16.msra.mxu0 0
    %168 = vmatprep.subr.bf16.mxu0 0
    %169 = vmatpush2.bf16.msra.mxu0 0
    %170 = vmatprep.subr.bf16.mxu0 0
    %171 = vmatpush2.bf16.msra.mxu0 0
    %172 = vmatprep.subr.bf16.mxu0 0
    %173 = vmatpush2.bf16.msra.mxu0 0
    %174 = vmatprep.subr.bf16.mxu0 0
    %175 = vmatpush2.bf16.msra.mxu0 0
    %176 = vmatprep.subr.bf16.mxu0 0
    %177 = vmatpush2.bf16.msra.mxu0 0
    %178 = vmatprep.subr.bf16.mxu0 0
    %179 = vmatpush2.bf16.msra.mxu0 0
    %180 = vmatprep.mubr.bf16.mxu0 0
    %181 = vmatmul.mubr.bf16.gmra.mxu0 %v137
    %v182 = vpop.f32.mrf.mxu0
    %v183 = vadd.f32 %v107, %v182
    %v184 = vpop.f32.mrf.mxu0
    %v185 = vpop.f32.mrf.mxu0
    %v186 = vadd.f32 %v107, %v185
    %v187 = vpop.f32.mrf.mxu0
    %188 = vmatprep.mubr.bf16.mxu0 0
    %189 = vmatmul.mubr.bf16.gmra.mxu0 %v140
    %v190 = vpop.f32.mrf.mxu0
    %v191 = vadd.f32 %v107, %v190
    %v192 = vpop.f32.mrf.mxu0
    %v193 = vpop.f32.mrf.mxu0
    %v194 = vadd.f32 %v107, %v193
    %v195 = vpop.f32.mrf.mxu0
    %196 = vmatprep.mubr.bf16.mxu0 0
    %197 = vmatmul.mubr.bf16.gmra.mxu0 %v143
    %v198 = vpop.f32.mrf.mxu0
    %v199 = vadd.f32 %v107, %v198
    %v200 = vpop.f32.mrf.mxu0
    %v201 = vpop.f32.mrf.mxu0
    %v202 = vadd.f32 %v107, %v201
    %v203 = vpop.f32.mrf.mxu0
    %204 = vmatprep.mubr.bf16.mxu0 0
    %205 = vmatmul.mubr.bf16.gmra.mxu0 %v146
    %v206 = vpop.f32.mrf.mxu0
    %v207 = vadd.f32 %v107, %v206
    %v208 = vpop.f32.mrf.mxu0
    %v209 = vpop.f32.mrf.mxu0
    %v210 = vadd.f32 %v107, %v209
    %v211 = vpop.f32.mrf.mxu0
    %212 = vdwg.mxu0
    %213 = vst [vmem:[#allocation2] sm:$0xff] %v183
    %214 = vst [vmem:[#allocation2 + $0x8] sm:$0xff] %v186
    %215 = vst [vmem:[#allocation2 + $0x10] sm:$0xff] %v191
    %216 = vst [vmem:[#allocation2 + $0x18] sm:$0xff] %v194
    %217 = vst [vmem:[#allocation2 + $0x20] sm:$0xff] %v199
    %218 = vst [vmem:[#allocation2 + $0x28] sm:$0xff] %v202
    %219 = vst [vmem:[#allocation2 + $0x30] sm:$0xff] %v207
    %220 = vst [vmem:[#allocation2 + $0x38] sm:$0xff] %v210
    %v221 = vld [vmem:[#allocation2] sm:$0xff]
    %v226 = vunpack.c.l.b16 %v90
    %v227 = vunpack.c.l.b16 %v91
    %v228 = vunpack.c.l.b16 %v92
    %v229 = vunpack.c.l.b16 %v93
    %v230 = vpack.c.b16 %v227, %v226
    %v231 = vpack.c.b16 %v229, %v228
    %vm234 = vcmask 261120
    %v236 = vsel %vm234, 0, 0
    %238 = vmatprep.subr.bf16.mxu0 0
    %239 = vmatpush1.bf16.msra.mxu0 0
    %240 = vmatprep.subr.bf16.mxu0 0
    %241 = vmatpush1.bf16.msra.mxu0 0
    %242 = vmatprep.subr.bf16.mxu0 0
    %243 = vmatpush1.bf16.msra.mxu0 0
    %244 = vmatprep.subr.bf16.mxu0 0
    %245 = vmatpush1.bf16.msra.mxu0 0
    %246 = vmatprep.subr.bf16.mxu0 0
    %247 = vmatpush1.bf16.msra.mxu0 0
    %248 = vmatprep.subr.bf16.mxu0 0
    %249 = vmatpush1.bf16.msra.mxu0 0
    %250 = vmatprep.subr.bf16.mxu0 0
    %251 = vmatpush1.bf16.msra.mxu0 %v231
    %252 = vmatprep.subr.bf16.mxu0 0
    %253 = vmatpush1.bf16.msra.mxu0 %v230
    %254 = vmatprep.subr.bf16.mxu0 0
    %255 = vmatpush2.bf16.msra.mxu0 0
    %256 = vmatprep.subr.bf16.mxu0 0
    %257 = vmatpush2.bf16.msra.mxu0 0
    %258 = vmatprep.subr.bf16.mxu0 0
    %259 = vmatpush2.bf16.msra.mxu0 0
    %260 = vmatprep.subr.bf16.mxu0 0
    %261 = vmatpush2.bf16.msra.mxu0 0
    %262 = vmatprep.subr.bf16.mxu0 0
    %263 = vmatpush2.bf16.msra.mxu0 0
    %264 = vmatprep.subr.bf16.mxu0 0
    %265 = vmatpush2.bf16.msra.mxu0 0
    %266 = vmatprep.subr.bf16.mxu0 0
    %267 = vmatpush2.bf16.msra.mxu0 0
    %268 = vmatprep.subr.bf16.mxu0 0
    %269 = vmatpush2.bf16.msra.mxu0 0
    %270 = vmatprep.mubr.bf16.mxu0 0
    %271 = vmatmul.mubr.bf16.gmra.mxu0 %v236
    %v272 = vpop.f32.mrf.mxu0
    %v273 = vadd.f32 0.0, %v272
    %v274 = vpop.f32.mrf.mxu0
    %v275 = vpop.f32.mrf.mxu0
    %v276 = vpop.f32.mrf.mxu0
    %277 = vdwg.mxu0
    %v278 = vadd.f32 %v221, %v273
    %v279 = vxor.u32 %v278, 2147483648
    %v280 = vmul.f32 %v279, 1.442695
    %v281 = vpow.pop %v280
    %v282 = vadd.f32 %v281, 1.0
    %v283 = vrcp.pop %v282
    %v284 = vmul.f32 1.0, %v283
    %v285 = vmul.f32 %v284, 2.0
    %v286 = vsub.f32 %v285, 1.0
    %v287 = vmul.f32 %v284, 0.0
    %289 = vrot.lane.b32.xlu0 %v286, 64
    %v290 = vpop.permute.xlu0 %289
    %v292 = vmul.f32 %v284, %v290
    %294 = vrot.lane.b32.xlu0 %v292, 32
    %v295 = vpop.permute.xlu0 %294
    %v297 = vadd.f32 %v287, %v295
    %v298 = vtanh.pop %v297
    %300 = vrot.lane.b32.xlu0 %v298, 64
    %v301 = vpop.permute.xlu0 %300
    %v303 = vmul.f32 %v284, %v301
    %v304 = vpack.c.bf16 %v303, %v303
    %v306 = vunpack.c.l.b16 %v304
    %v307 = vpack.c.b16 %v306, %v306
    %308 = vrot.lane.b32.xlu0 %v307, 32
    %v309 = vpop.permute.xlu0 %308
    %vm311 = vcmask 257024
    %312 = vst.msk [vmem:[#allocation3] sm:$0xf] %vm311, %v309
    %s313 = scalar_lea.vmem [#allocation2], 8
    %v314 = vld [vmem:[%s313] sm:$0xff]
    %315 = vrot.lane.b32.xlu0 %v304, 32
    %v316 = vpop.permute.xlu0 %315
    %v318 = vsel %vm234, %v316, 0
    %320 = vmatprep.subr.bf16.mxu0 0
    %321 = vmatpush1.bf16.msra.mxu0 0
    %322 = vmatprep.subr.bf16.mxu0 0
    %323 = vmatpush1.bf16.msra.mxu0 0
    %324 = vmatprep.subr.bf16.mxu0 0
    %325 = vmatpush1.bf16.msra.mxu0 0
    %326 = vmatprep.subr.bf16.mxu0 0
    %327 = vmatpush1.bf16.msra.mxu0 0
    %328 = vmatprep.subr.bf16.mxu0 0
    %329 = vmatpush1.bf16.msra.mxu0 0
    %330 = vmatprep.subr.bf16.mxu0 0
    %331 = vmatpush1.bf16.msra.mxu0 0
    %332 = vmatprep.subr.bf16.mxu0 0
    %333 = vmatpush1.bf16.msra.mxu0 %v231
    %334 = vmatprep.subr.bf16.mxu0 0
    %335 = vmatpush1.bf16.msra.mxu0 %v230
    %336 = vmatprep.subr.bf16.mxu0 0
    %337 = vmatpush2.bf16.msra.mxu0 0
    %338 = vmatprep.subr.bf16.mxu0 0
    %339 = vmatpush2.bf16.msra.mxu0 0
    %340 = vmatprep.subr.bf16.mxu0 0
    %341 = vmatpush2.bf16.msra.mxu0 0
    %342 = vmatprep.subr.bf16.mxu0 0
    %343 = vmatpush2.bf16.msra.mxu0 0
    %344 = vmatprep.subr.bf16.mxu0 0
    %345 = vmatpush2.bf16.msra.mxu0 0
    %346 = vmatprep.subr.bf16.mxu0 0
    %347 = vmatpush2.bf16.msra.mxu0 0
    %348 = vmatprep.subr.bf16.mxu0 0
    %349 = vmatpush2.bf16.msra.mxu0 0
    %350 = vmatprep.subr.bf16.mxu0 0
    %351 = vmatpush2.bf16.msra.mxu0 0
    %352 = vmatprep.mubr.bf16.mxu0 0
    %353 = vmatmul.mubr.bf16.gmra.mxu0 %v318
    %v354 = vpop.f32.mrf.mxu0
    %v355 = vadd.f32 0.0, %v354
    %v356 = vpop.f32.mrf.mxu0
    %v357 = vpop.f32.mrf.mxu0
    %v358 = vpop.f32.mrf.mxu0
    %359 = vdwg.mxu0
    %v360 = vadd.f32 %v314, %v355
    %v361 = vxor.u32 %v360, 2147483648
    %v362 = vmul.f32 %v361, 1.442695
    %v363 = vpow.pop %v362
    %v364 = vadd.f32 %v363, 1.0
    %v365 = vrcp.pop %v364
    %v366 = vmul.f32 1.0, %v365
    %v367 = vmul.f32 %v366, 2.0
    %v368 = vsub.f32 %v367, 1.0
    %v369 = vmul.f32 %v366, %v297
    %371 = vrot.lane.b32.xlu0 %v368, 64
    %v372 = vpop.permute.xlu0 %371
    %v374 = vmul.f32 %v366, %v372
    %376 = vrot.lane.b32.xlu0 %v374, 32
    %v377 = vpop.permute.xlu0 %376
    %v379 = vadd.f32 %v369, %v377
    %v380 = vtanh.pop %v379
    %382 = vrot.lane.b32.xlu0 %v380, 64
    %v383 = vpop.permute.xlu0 %382
    %v385 = vmul.f32 %v366, %v383
    %v386 = vpack.c.bf16 %v385, %v385
    %v388 = vunpack.c.l.b16 %v386
    %v389 = vpack.c.b16 %v388, %v388
    %390 = vrot.lane.b32.xlu0 %v389, 32
    %v391 = vpop.permute.xlu0 %390
    %s393 = scalar_lea.vmem [#allocation3], 4
    %394 = vst.msk [vmem:[%s393] sm:$0xf] %vm311, %v391
    %s395 = scalar_lea.vmem [#allocation2], 16
    %v396 = vld [vmem:[%s395] sm:$0xff]
    %397 = vrot.lane.b32.xlu0 %v386, 32
    %v398 = vpop.permute.xlu0 %397
    %v400 = vsel %vm234, %v398, 0
    %402 = vmatprep.subr.bf16.mxu0 0
    %403 = vmatpush1.bf16.msra.mxu0 0
    %404 = vmatprep.subr.bf16.mxu0 0
    %405 = vmatpush1.bf16.msra.mxu0 0
    %406 = vmatprep.subr.bf16.mxu0 0
    %407 = vmatpush1.bf16.msra.mxu0 0
    %408 = vmatprep.subr.bf16.mxu0 0
    %409 = vmatpush1.bf16.msra.mxu0 0
    %410 = vmatprep.subr.bf16.mxu0 0
    %411 = vmatpush1.bf16.msra.mxu0 0
    %412 = vmatprep.subr.bf16.mxu0 0
    %413 = vmatpush1.bf16.msra.mxu0 0
    %414 = vmatprep.subr.bf16.mxu0 0
    %415 = vmatpush1.bf16.msra.mxu0 %v231
    %416 = vmatprep.subr.bf16.mxu0 0
    %417 = vmatpush1.bf16.msra.mxu0 %v230
    %418 = vmatprep.subr.bf16.mxu0 0
    %419 = vmatpush2.bf16.msra.mxu0 0
    %420 = vmatprep.subr.bf16.mxu0 0
    %421 = vmatpush2.bf16.msra.mxu0 0
    %422 = vmatprep.subr.bf16.mxu0 0
    %423 = vmatpush2.bf16.msra.mxu0 0
    %424 = vmatprep.subr.bf16.mxu0 0
    %425 = vmatpush2.bf16.msra.mxu0 0
    %426 = vmatprep.subr.bf16.mxu0 0
    %427 = vmatpush2.bf16.msra.mxu0 0
    %428 = vmatprep.subr.bf16.mxu0 0
    %429 = vmatpush2.bf16.msra.mxu0 0
    %430 = vmatprep.subr.bf16.mxu0 0
    %431 = vmatpush2.bf16.msra.mxu0 0
    %432 = vmatprep.subr.bf16.mxu0 0
    %433 = vmatpush2.bf16.msra.mxu0 0
    %434 = vmatprep.mubr.bf16.mxu0 0
    %435 = vmatmul.mubr.bf16.gmra.mxu0 %v400
    %v436 = vpop.f32.mrf.mxu0
    %v437 = vadd.f32 0.0, %v436
    %v438 = vpop.f32.mrf.mxu0
    %v439 = vpop.f32.mrf.mxu0
    %v440 = vpop.f32.mrf.mxu0
    %441 = vdwg.mxu0
    %v442 = vadd.f32 %v396, %v437
    %v443 = vxor.u32 %v442, 2147483648
    %v444 = vmul.f32 %v443, 1.442695
    %v445 = vpow.pop %v444
    %v446 = vadd.f32 %v445, 1.0
    %v447 = vrcp.pop %v446
    %v448 = vmul.f32 1.0, %v447
    %v449 = vmul.f32 %v448, 2.0
    %v450 = vsub.f32 %v449, 1.0
    %v451 = vmul.f32 %v448, %v379
    %453 = vrot.lane.b32.xlu0 %v450, 64
    %v454 = vpop.permute.xlu0 %453
    %v456 = vmul.f32 %v448, %v454
    %458 = vrot.lane.b32.xlu0 %v456, 32
    %v459 = vpop.permute.xlu0 %458
    %v461 = vadd.f32 %v451, %v459
    %v462 = vtanh.pop %v461
    %464 = vrot.lane.b32.xlu0 %v462, 64
    %v465 = vpop.permute.xlu0 %464
    %v467 = vmul.f32 %v448, %v465
    %v468 = vpack.c.bf16 %v467, %v467
    %v470 = vunpack.c.l.b16 %v468
    %v471 = vpack.c.b16 %v470, %v470
    %472 = vrot.lane.b32.xlu0 %v471, 32
    %v473 = vpop.permute.xlu0 %472
    %s475 = scalar_lea.vmem [#allocation3], 8
    %476 = vst.msk [vmem:[%s475] sm:$0xf] %vm311, %v473
    %s477 = scalar_lea.vmem [#allocation2], 24
    %v478 = vld [vmem:[%s477] sm:$0xff]
    %479 = vrot.lane.b32.xlu0 %v468, 32
    %v480 = vpop.permute.xlu0 %479
    %v482 = vsel %vm234, %v480, 0
    %484 = vmatprep.subr.bf16.mxu0 0
    %485 = vmatpush1.bf16.msra.mxu0 0
    %486 = vmatprep.subr.bf16.mxu0 0
    %487 = vmatpush1.bf16.msra.mxu0 0
    %488 = vmatprep.subr.bf16.mxu0 0
    %489 = vmatpush1.bf16.msra.mxu0 0
    %490 = vmatprep.subr.bf16.mxu0 0
    %491 = vmatpush1.bf16.msra.mxu0 0
    %492 = vmatprep.subr.bf16.mxu0 0
    %493 = vmatpush1.bf16.msra.mxu0 0
    %494 = vmatprep.subr.bf16.mxu0 0
    %495 = vmatpush1.bf16.msra.mxu0 0
    %496 = vmatprep.subr.bf16.mxu0 0
    %497 = vmatpush1.bf16.msra.mxu0 %v231
    %498 = vmatprep.subr.bf16.mxu0 0
    %499 = vmatpush1.bf16.msra.mxu0 %v230
    %500 = vmatprep.subr.bf16.mxu0 0
    %501 = vmatpush2.bf16.msra.mxu0 0
    %502 = vmatprep.subr.bf16.mxu0 0
    %503 = vmatpush2.bf16.msra.mxu0 0
    %504 = vmatprep.subr.bf16.mxu0 0
    %505 = vmatpush2.bf16.msra.mxu0 0
    %506 = vmatprep.subr.bf16.mxu0 0
    %507 = vmatpush2.bf16.msra.mxu0 0
    %508 = vmatprep.subr.bf16.mxu0 0
    %509 = vmatpush2.bf16.msra.mxu0 0
    %510 = vmatprep.subr.bf16.mxu0 0
    %511 = vmatpush2.bf16.msra.mxu0 0
    %512 = vmatprep.subr.bf16.mxu0 0
    %513 = vmatpush2.bf16.msra.mxu0 0
    %514 = vmatprep.subr.bf16.mxu0 0
    %515 = vmatpush2.bf16.msra.mxu0 0
    %516 = vmatprep.mubr.bf16.mxu0 0
    %517 = vmatmul.mubr.bf16.gmra.mxu0 %v482
    %v518 = vpop.f32.mrf.mxu0
    %v519 = vadd.f32 0.0, %v518
    %v520 = vpop.f32.mrf.mxu0
    %v521 = vpop.f32.mrf.mxu0
    %v522 = vpop.f32.mrf.mxu0
    %523 = vdwg.mxu0
    %v524 = vadd.f32 %v478, %v519
    %v525 = vxor.u32 %v524, 2147483648
    %v526 = vmul.f32 %v525, 1.442695
    %v527 = vpow.pop %v526
    %v528 = vadd.f32 %v527, 1.0
    %v529 = vrcp.pop %v528
    %v530 = vmul.f32 1.0, %v529
    %v531 = vmul.f32 %v530, 2.0
    %v532 = vsub.f32 %v531, 1.0
    %v533 = vmul.f32 %v530, %v461
    %535 = vrot.lane.b32.xlu0 %v532, 64
    %v536 = vpop.permute.xlu0 %535
    %v538 = vmul.f32 %v530, %v536
    %540 = vrot.lane.b32.xlu0 %v538, 32
    %v541 = vpop.permute.xlu0 %540
    %v543 = vadd.f32 %v533, %v541
    %v544 = vtanh.pop %v543
    %546 = vrot.lane.b32.xlu0 %v544, 64
    %v547 = vpop.permute.xlu0 %546
    %v549 = vmul.f32 %v530, %v547
    %v550 = vpack.c.bf16 %v549, %v549
    %v552 = vunpack.c.l.b16 %v550
    %v553 = vpack.c.b16 %v552, %v552
    %554 = vrot.lane.b32.xlu0 %v553, 32
    %v555 = vpop.permute.xlu0 %554
    %s557 = scalar_lea.vmem [#allocation3], 12
    %558 = vst.msk [vmem:[%s557] sm:$0xf] %vm311, %v555
    %s559 = scalar_lea.vmem [#allocation2], 32
    %v560 = vld [vmem:[%s559] sm:$0xff]
    %561 = vrot.lane.b32.xlu0 %v550, 32
    %v562 = vpop.permute.xlu0 %561
    %v564 = vsel %vm234, %v562, 0
    %566 = vmatprep.subr.bf16.mxu0 0
    %567 = vmatpush1.bf16.msra.mxu0 0
    %568 = vmatprep.subr.bf16.mxu0 0
    %569 = vmatpush1.bf16.msra.mxu0 0
    %570 = vmatprep.subr.bf16.mxu0 0
    %571 = vmatpush1.bf16.msra.mxu0 0
    %572 = vmatprep.subr.bf16.mxu0 0
    %573 = vmatpush1.bf16.msra.mxu0 0
    %574 = vmatprep.subr.bf16.mxu0 0
    %575 = vmatpush1.bf16.msra.mxu0 0
    %576 = vmatprep.subr.bf16.mxu0 0
    %577 = vmatpush1.bf16.msra.mxu0 0
    %578 = vmatprep.subr.bf16.mxu0 0
    %579 = vmatpush1.bf16.msra.mxu0 %v231
    %580 = vmatprep.subr.bf16.mxu0 0
    %581 = vmatpush1.bf16.msra.mxu0 %v230
    %582 = vmatprep.subr.bf16.mxu0 0
    %583 = vmatpush2.bf16.msra.mxu0 0
    %584 = vmatprep.subr.bf16.mxu0 0
    %585 = vmatpush2.bf16.msra.mxu0 0
    %586 = vmatprep.subr.bf16.mxu0 0
    %587 = vmatpush2.bf16.msra.mxu0 0
    %588 = vmatprep.subr.bf16.mxu0 0
    %589 = vmatpush2.bf16.msra.mxu0 0
    %590 = vmatprep.subr.bf16.mxu0 0
    %591 = vmatpush2.bf16.msra.mxu0 0
    %592 = vmatprep.subr.bf16.mxu0 0
    %593 = vmatpush2.bf16.msra.mxu0 0
    %594 = vmatprep.subr.bf16.mxu0 0
    %595 = vmatpush2.bf16.msra.mxu0 0
    %596 = vmatprep.subr.bf16.mxu0 0
    %597 = vmatpush2.bf16.msra.mxu0 0
    %598 = vmatprep.mubr.bf16.mxu0 0
    %599 = vmatmul.mubr.bf16.gmra.mxu0 %v564
    %v600 = vpop.f32.mrf.mxu0
    %v601 = vadd.f32 0.0, %v600
    %v602 = vpop.f32.mrf.mxu0
    %v603 = vpop.f32.mrf.mxu0
    %v604 = vpop.f32.mrf.mxu0
    %605 = vdwg.mxu0
    %v606 = vadd.f32 %v560, %v601
    %v607 = vxor.u32 %v606, 2147483648
    %v608 = vmul.f32 %v607, 1.442695
    %v609 = vpow.pop %v608
    %v610 = vadd.f32 %v609, 1.0
    %v611 = vrcp.pop %v610
    %v612 = vmul.f32 1.0, %v611
    %v613 = vmul.f32 %v612, 2.0
    %v614 = vsub.f32 %v613, 1.0
    %v615 = vmul.f32 %v612, %v543
    %617 = vrot.lane.b32.xlu0 %v614, 64
    %v618 = vpop.permute.xlu0 %617
    %v620 = vmul.f32 %v612, %v618
    %622 = vrot.lane.b32.xlu0 %v620, 32
    %v623 = vpop.permute.xlu0 %622
    %v625 = vadd.f32 %v615, %v623
    %v626 = vtanh.pop %v625
    %628 = vrot.lane.b32.xlu0 %v626, 64
    %v629 = vpop.permute.xlu0 %628
    %v631 = vmul.f32 %v612, %v629
    %v632 = vpack.c.bf16 %v631, %v631
    %v634 = vunpack.c.l.b16 %v632
    %v635 = vpack.c.b16 %v634, %v634
    %636 = vrot.lane.b32.xlu0 %v635, 32
    %v637 = vpop.permute.xlu0 %636
    %s639 = scalar_lea.vmem [#allocation3], 16
    %640 = vst.msk [vmem:[%s639] sm:$0xf] %vm311, %v637
    %s641 = scalar_lea.vmem [#allocation2], 40
    %v642 = vld [vmem:[%s641] sm:$0xff]
    %643 = vrot.lane.b32.xlu0 %v632, 32
    %v644 = vpop.permute.xlu0 %643
    %v646 = vsel %vm234, %v644, 0
    %648 = vmatprep.subr.bf16.mxu0 0
    %649 = vmatpush1.bf16.msra.mxu0 0
    %650 = vmatprep.subr.bf16.mxu0 0
    %651 = vmatpush1.bf16.msra.mxu0 0
    %652 = vmatprep.subr.bf16.mxu0 0
    %653 = vmatpush1.bf16.msra.mxu0 0
    %654 = vmatprep.subr.bf16.mxu0 0
    %655 = vmatpush1.bf16.msra.mxu0 0
    %656 = vmatprep.subr.bf16.mxu0 0
    %657 = vmatpush1.bf16.msra.mxu0 0
    %658 = vmatprep.subr.bf16.mxu0 0
    %659 = vmatpush1.bf16.msra.mxu0 0
    %660 = vmatprep.subr.bf16.mxu0 0
    %661 = vmatpush1.bf16.msra.mxu0 %v231
    %662 = vmatprep.subr.bf16.mxu0 0
    %663 = vmatpush1.bf16.msra.mxu0 %v230
    %664 = vmatprep.subr.bf16.mxu0 0
    %665 = vmatpush2.bf16.msra.mxu0 0
    %666 = vmatprep.subr.bf16.mxu0 0
    %667 = vmatpush2.bf16.msra.mxu0 0
    %668 = vmatprep.subr.bf16.mxu0 0
    %669 = vmatpush2.bf16.msra.mxu0 0
    %670 = vmatprep.subr.bf16.mxu0 0
    %671 = vmatpush2.bf16.msra.mxu0 0
    %672 = vmatprep.subr.bf16.mxu0 0
    %673 = vmatpush2.bf16.msra.mxu0 0
    %674 = vmatprep.subr.bf16.mxu0 0
    %675 = vmatpush2.bf16.msra.mxu0 0
    %676 = vmatprep.subr.bf16.mxu0 0
    %677 = vmatpush2.bf16.msra.mxu0 0
    %678 = vmatprep.subr.bf16.mxu0 0
    %679 = vmatpush2.bf16.msra.mxu0 0
    %680 = vmatprep.mubr.bf16.mxu0 0
    %681 = vmatmul.mubr.bf16.gmra.mxu0 %v646
    %v682 = vpop.f32.mrf.mxu0
    %v683 = vadd.f32 0.0, %v682
    %v684 = vpop.f32.mrf.mxu0
    %v685 = vpop.f32.mrf.mxu0
    %v686 = vpop.f32.mrf.mxu0
    %687 = vdwg.mxu0
    %v688 = vadd.f32 %v642, %v683
    %v689 = vxor.u32 %v688, 2147483648
    %v690 = vmul.f32 %v689, 1.442695
    %v691 = vpow.pop %v690
    %v692 = vadd.f32 %v691, 1.0
    %v693 = vrcp.pop %v692
    %v694 = vmul.f32 1.0, %v693
    %v695 = vmul.f32 %v694, 2.0
    %v696 = vsub.f32 %v695, 1.0
    %v697 = vmul.f32 %v694, %v625
    %699 = vrot.lane.b32.xlu0 %v696, 64
    %v700 = vpop.permute.xlu0 %699
    %v702 = vmul.f32 %v694, %v700
    %704 = vrot.lane.b32.xlu0 %v702, 32
    %v705 = vpop.permute.xlu0 %704
    %v707 = vadd.f32 %v697, %v705
    %v708 = vtanh.pop %v707
    %710 = vrot.lane.b32.xlu0 %v708, 64
    %v711 = vpop.permute.xlu0 %710
    %v713 = vmul.f32 %v694, %v711
    %v714 = vpack.c.bf16 %v713, %v713
    %v716 = vunpack.c.l.b16 %v714
    %v717 = vpack.c.b16 %v716, %v716
    %718 = vrot.lane.b32.xlu0 %v717, 32
    %v719 = vpop.permute.xlu0 %718
    %s721 = scalar_lea.vmem [#allocation3], 20
    %722 = vst.msk [vmem:[%s721] sm:$0xf] %vm311, %v719
    %s723 = scalar_lea.vmem [#allocation2], 48
    %v724 = vld [vmem:[%s723] sm:$0xff]
    %725 = vrot.lane.b32.xlu0 %v714, 32
    %v726 = vpop.permute.xlu0 %725
    %v728 = vsel %vm234, %v726, 0
    %730 = vmatprep.subr.bf16.mxu0 0
    %731 = vmatpush1.bf16.msra.mxu0 0
    %732 = vmatprep.subr.bf16.mxu0 0
    %733 = vmatpush1.bf16.msra.mxu0 0
    %734 = vmatprep.subr.bf16.mxu0 0
    %735 = vmatpush1.bf16.msra.mxu0 0
    %736 = vmatprep.subr.bf16.mxu0 0
    %737 = vmatpush1.bf16.msra.mxu0 0
    %738 = vmatprep.subr.bf16.mxu0 0
    %739 = vmatpush1.bf16.msra.mxu0 0
    %740 = vmatprep.subr.bf16.mxu0 0
    %741 = vmatpush1.bf16.msra.mxu0 0
    %742 = vmatprep.subr.bf16.mxu0 0
    %743 = vmatpush1.bf16.msra.mxu0 %v231
    %744 = vmatprep.subr.bf16.mxu0 0
    %745 = vmatpush1.bf16.msra.mxu0 %v230
    %746 = vmatprep.subr.bf16.mxu0 0
    %747 = vmatpush2.bf16.msra.mxu0 0
    %748 = vmatprep.subr.bf16.mxu0 0
    %749 = vmatpush2.bf16.msra.mxu0 0
    %750 = vmatprep.subr.bf16.mxu0 0
    %751 = vmatpush2.bf16.msra.mxu0 0
    %752 = vmatprep.subr.bf16.mxu0 0
    %753 = vmatpush2.bf16.msra.mxu0 0
    %754 = vmatprep.subr.bf16.mxu0 0
    %755 = vmatpush2.bf16.msra.mxu0 0
    %756 = vmatprep.subr.bf16.mxu0 0
    %757 = vmatpush2.bf16.msra.mxu0 0
    %758 = vmatprep.subr.bf16.mxu0 0
    %759 = vmatpush2.bf16.msra.mxu0 0
    %760 = vmatprep.subr.bf16.mxu0 0
    %761 = vmatpush2.bf16.msra.mxu0 0
    %762 = vmatprep.mubr.bf16.mxu0 0
    %763 = vmatmul.mubr.bf16.gmra.mxu0 %v728
    %v764 = vpop.f32.mrf.mxu0
    %v765 = vadd.f32 0.0, %v764
    %v766 = vpop.f32.mrf.mxu0
    %v767 = vpop.f32.mrf.mxu0
    %v768 = vpop.f32.mrf.mxu0
    %769 = vdwg.mxu0
    %v770 = vadd.f32 %v724, %v765
    %v771 = vxor.u32 %v770, 2147483648
    %v772 = vmul.f32 %v771, 1.442695
    %v773 = vpow.pop %v772
    %v774 = vadd.f32 %v773, 1.0
    %v775 = vrcp.pop %v774
    %v776 = vmul.f32 1.0, %v775
    %v777 = vmul.f32 %v776, 2.0
    %v778 = vsub.f32 %v777, 1.0
    %v779 = vmul.f32 %v776, %v707
    %781 = vrot.lane.b32.xlu0 %v778, 64
    %v782 = vpop.permute.xlu0 %781
    %v784 = vmul.f32 %v776, %v782
    %786 = vrot.lane.b32.xlu0 %v784, 32
    %v787 = vpop.permute.xlu0 %786
    %v789 = vadd.f32 %v779, %v787
    %v790 = vtanh.pop %v789
    %792 = vrot.lane.b32.xlu0 %v790, 64
    %v793 = vpop.permute.xlu0 %792
    %v795 = vmul.f32 %v776, %v793
    %v796 = vpack.c.bf16 %v795, %v795
    %v798 = vunpack.c.l.b16 %v796
    %v799 = vpack.c.b16 %v798, %v798
    %800 = vrot.lane.b32.xlu0 %v799, 32
    %v801 = vpop.permute.xlu0 %800
    %s803 = scalar_lea.vmem [#allocation3], 24
    %804 = vst.msk [vmem:[%s803] sm:$0xf] %vm311, %v801
    %s805 = scalar_lea.vmem [#allocation2], 56
    %v806 = vld [vmem:[%s805] sm:$0xff]
    %807 = vrot.lane.b32.xlu0 %v796, 32
    %v808 = vpop.permute.xlu0 %807
    %v810 = vsel %vm234, %v808, 0
    %812 = vmatprep.subr.bf16.mxu0 0
    %813 = vmatpush1.bf16.msra.mxu0 0
    %814 = vmatprep.subr.bf16.mxu0 0
    %815 = vmatpush1.bf16.msra.mxu0 0
    %816 = vmatprep.subr.bf16.mxu0 0
    %817 = vmatpush1.bf16.msra.mxu0 0
    %818 = vmatprep.subr.bf16.mxu0 0
    %819 = vmatpush1.bf16.msra.mxu0 0
    %820 = vmatprep.subr.bf16.mxu0 0
    %821 = vmatpush1.bf16.msra.mxu0 0
    %822 = vmatprep.subr.bf16.mxu0 0
    %823 = vmatpush1.bf16.msra.mxu0 0
    %824 = vmatprep.subr.bf16.mxu0 0
    %825 = vmatpush1.bf16.msra.mxu0 %v231
    %826 = vmatprep.subr.bf16.mxu0 0
    %827 = vmatpush1.bf16.msra.mxu0 %v230
    %828 = vmatprep.subr.bf16.mxu0 0
    %829 = vmatpush2.bf16.msra.mxu0 0
    %830 = vmatprep.subr.bf16.mxu0 0
    %831 = vmatpush2.bf16.msra.mxu0 0
    %832 = vmatprep.subr.bf16.mxu0 0
    %833 = vmatpush2.bf16.msra.mxu0 0
    %834 = vmatprep.subr.bf16.mxu0 0
    %835 = vmatpush2.bf16.msra.mxu0 0
    %836 = vmatprep.subr.bf16.mxu0 0
    %837 = vmatpush2.bf16.msra.mxu0 0
    %838 = vmatprep.subr.bf16.mxu0 0
    %839 = vmatpush2.bf16.msra.mxu0 0
    %840 = vmatprep.subr.bf16.mxu0 0
    %841 = vmatpush2.bf16.msra.mxu0 0
    %842 = vmatprep.subr.bf16.mxu0 0
    %843 = vmatpush2.bf16.msra.mxu0 0
    %844 = vmatprep.mubr.bf16.mxu0 0
    %845 = vmatmul.mubr.bf16.gmra.mxu0 %v810
    %v846 = vpop.f32.mrf.mxu0
    %v847 = vadd.f32 0.0, %v846
    %v848 = vpop.f32.mrf.mxu0
    %v849 = vpop.f32.mrf.mxu0
    %v850 = vpop.f32.mrf.mxu0
    %851 = vdwg.mxu0
    %v852 = vadd.f32 %v806, %v847
    %v853 = vxor.u32 %v852, 2147483648
    %v854 = vmul.f32 %v853, 1.442695
    %v855 = vpow.pop %v854
    %v856 = vadd.f32 %v855, 1.0
    %v857 = vrcp.pop %v856
    %v858 = vmul.f32 1.0, %v857
    %v859 = vmul.f32 %v858, 2.0
    %v860 = vsub.f32 %v859, 1.0
    %v861 = vmul.f32 %v858, %v789
    %863 = vrot.lane.b32.xlu0 %v860, 64
    %v864 = vpop.permute.xlu0 %863
    %v866 = vmul.f32 %v858, %v864
    %868 = vrot.lane.b32.xlu0 %v866, 32
    %v869 = vpop.permute.xlu0 %868
    %v871 = vadd.f32 %v861, %v869
    %v872 = vtanh.pop %v871
    %874 = vrot.lane.b32.xlu0 %v872, 64
    %v875 = vpop.permute.xlu0 %874
    %v877 = vmul.f32 %v858, %v875
    %v878 = vpack.c.bf16 %v877, %v877
    %v880 = vunpack.c.l.b16 %v878
    %v881 = vpack.c.b16 %v880, %v880
    %882 = vrot.lane.b32.xlu0 %v881, 32
    %v883 = vpop.permute.xlu0 %882
    %s885 = scalar_lea.vmem [#allocation3], 28
    %886 = vst.msk [vmem:[%s885] sm:$0xf] %vm311, %v883
    %v887 = vld [vmem:[#allocation8] sm:$0xf]
    %v888 = vld [vmem:[#allocation8 + $0x4] sm:$0xf]
    %v889 = vld [vmem:[#allocation8 + $0x8] sm:$0xf]
    %v890 = vld [vmem:[#allocation8 + $0xc] sm:$0xf]
    %v891 = vld [vmem:[#allocation9] sm:$0xf]
    %v892 = vld [vmem:[#allocation9 + $0x4] sm:$0xf]
    %v893 = vld [vmem:[#allocation9 + $0x8] sm:$0xf]
    %v894 = vld [vmem:[#allocation9 + $0xc] sm:$0xf]
    %v895 = vld [vmem:[%s6] sm:$0x1]
    %v896 = vld [vmem:[#allocation3] sm:$0xf]
    %v897 = vld [vmem:[#allocation3 + $0x4] sm:$0xf]
    %v898 = vld [vmem:[#allocation3 + $0x8] sm:$0xf]
    %v899 = vld [vmem:[#allocation3 + $0xc] sm:$0xf]
    %v900 = vld [vmem:[#allocation3 + $0x10] sm:$0xf]
    %v901 = vld [vmem:[#allocation3 + $0x14] sm:$0xf]
    %v902 = vld [vmem:[#allocation3 + $0x18] sm:$0xf]
    %v903 = vld [vmem:[#allocation3 + $0x1c] sm:$0xf]
    %v905 = vlaneseq
    %v906 = vshrl.u32 %v905, 7
    %v907 = vsub.s32 0, %v906
    %v908 = vrot.slane %v895, %v907
    %v918 = vunpack.c.l.b16 %v896
    %v919 = vunpack.c.l.b16 %v897
    %v920 = vunpack.c.l.b16 %v898
    %v921 = vunpack.c.l.b16 %v899
    %v922 = vunpack.c.l.b16 %v900
    %v923 = vunpack.c.l.b16 %v901
    %v924 = vunpack.c.l.b16 %v902
    %v925 = vunpack.c.l.b16 %v903
    %v926 = vpack.c.b16 %v919, %v918
    %v927 = vpack.c.b16 %v921, %v920
    %v928 = vpack.c.b16 %v923, %v922
    %v929 = vpack.c.b16 %v925, %v924
    %v934 = vunpack.c.l.b16 %v887
    %v935 = vunpack.c.l.b16 %v888
    %v936 = vunpack.c.l.b16 %v889
    %v937 = vunpack.c.l.b16 %v890
    %v938 = vpack.c.b16 %v935, %v934
    %v939 = vpack.c.b16 %v937, %v936
    %v943 = vsel %vm234, %v926, 0
    %v946 = vsel %vm234, %v927, 0
    %v949 = vsel %vm234, %v928, 0
    %v952 = vsel %vm234, %v929, 0
    %954 = vmatprep.subr.bf16.mxu0 0
    %955 = vmatpush1.bf16.msra.mxu0 0
    %956 = vmatprep.subr.bf16.mxu0 0
    %957 = vmatpush1.bf16.msra.mxu0 0
    %958 = vmatprep.subr.bf16.mxu0 0
    %959 = vmatpush1.bf16.msra.mxu0 0
    %960 = vmatprep.subr.bf16.mxu0 0
    %961 = vmatpush1.bf16.msra.mxu0 0
    %962 = vmatprep.subr.bf16.mxu0 0
    %963 = vmatpush1.bf16.msra.mxu0 0
    %964 = vmatprep.subr.bf16.mxu0 0
    %965 = vmatpush1.bf16.msra.mxu0 0
    %966 = vmatprep.subr.bf16.mxu0 0
    %967 = vmatpush1.bf16.msra.mxu0 %v939
    %968 = vmatprep.subr.bf16.mxu0 0
    %969 = vmatpush1.bf16.msra.mxu0 %v938
    %970 = vmatprep.subr.bf16.mxu0 0
    %971 = vmatpush2.bf16.msra.mxu0 0
    %972 = vmatprep.subr.bf16.mxu0 0
    %973 = vmatpush2.bf16.msra.mxu0 0
    %974 = vmatprep.subr.bf16.mxu0 0
    %975 = vmatpush2.bf16.msra.mxu0 0
    %976 = vmatprep.subr.bf16.mxu0 0
    %977 = vmatpush2.bf16.msra.mxu0 0
    %978 = vmatprep.subr.bf16.mxu0 0
    %979 = vmatpush2.bf16.msra.mxu0 0
    %980 = vmatprep.subr.bf16.mxu0 0
    %981 = vmatpush2.bf16.msra.mxu0 0
    %982 = vmatprep.subr.bf16.mxu0 0
    %983 = vmatpush2.bf16.msra.mxu0 0
    %984 = vmatprep.subr.bf16.mxu0 0
    %985 = vmatpush2.bf16.msra.mxu0 0
    %986 = vmatprep.mubr.bf16.mxu0 0
    %987 = vmatmul.mubr.bf16.gmra.mxu0 %v943
    %v988 = vpop.f32.mrf.mxu0
    %v989 = vadd.f32 %v908, %v988
    %v990 = vpop.f32.mrf.mxu0
    %v991 = vpop.f32.mrf.mxu0
    %v992 = vadd.f32 %v908, %v991
    %v993 = vpop.f32.mrf.mxu0
    %994 = vmatprep.mubr.bf16.mxu0 0
    %995 = vmatmul.mubr.bf16.gmra.mxu0 %v946
    %v996 = vpop.f32.mrf.mxu0
    %v997 = vadd.f32 %v908, %v996
    %v998 = vpop.f32.mrf.mxu0
    %v999 = vpop.f32.mrf.mxu0
    %v1000 = vadd.f32 %v908, %v999
    %v1001 = vpop.f32.mrf.mxu0
    %1002 = vmatprep.mubr.bf16.mxu0 0
    %1003 = vmatmul.mubr.bf16.gmra.mxu0 %v949
    %v1004 = vpop.f32.mrf.mxu0
    %v1005 = vadd.f32 %v908, %v1004
    %v1006 = vpop.f32.mrf.mxu0
    %v1007 = vpop.f32.mrf.mxu0
    %v1008 = vadd.f32 %v908, %v1007
    %v1009 = vpop.f32.mrf.mxu0
    %1010 = vmatprep.mubr.bf16.mxu0 0
    %1011 = vmatmul.mubr.bf16.gmra.mxu0 %v952
    %v1012 = vpop.f32.mrf.mxu0
    %v1013 = vadd.f32 %v908, %v1012
    %v1014 = vpop.f32.mrf.mxu0
    %v1015 = vpop.f32.mrf.mxu0
    %v1016 = vadd.f32 %v908, %v1015
    %v1017 = vpop.f32.mrf.mxu0
    %1018 = vdwg.mxu0
    %1019 = vst [vmem:[#allocation2] sm:$0xff] %v989
    %1020 = vst [vmem:[#allocation2 + $0x8] sm:$0xff] %v992
    %1021 = vst [vmem:[#allocation2 + $0x10] sm:$0xff] %v997
    %1022 = vst [vmem:[#allocation2 + $0x18] sm:$0xff] %v1000
    %1023 = vst [vmem:[#allocation2 + $0x20] sm:$0xff] %v1005
    %1024 = vst [vmem:[#allocation2 + $0x28] sm:$0xff] %v1008
    %1025 = vst [vmem:[#allocation2 + $0x30] sm:$0xff] %v1013
    %1026 = vst [vmem:[#allocation2 + $0x38] sm:$0xff] %v1016
    %v1027 = vld [vmem:[#allocation2] sm:$0xff]
    %v1032 = vunpack.c.l.b16 %v891
    %v1033 = vunpack.c.l.b16 %v892
    %v1034 = vunpack.c.l.b16 %v893
    %v1035 = vunpack.c.l.b16 %v894
    %v1036 = vpack.c.b16 %v1033, %v1032
    %v1037 = vpack.c.b16 %v1035, %v1034
    %1040 = vmatprep.subr.bf16.mxu0 0
    %1041 = vmatpush1.bf16.msra.mxu0 0
    %1042 = vmatprep.subr.bf16.mxu0 0
    %1043 = vmatpush1.bf16.msra.mxu0 0
    %1044 = vmatprep.subr.bf16.mxu0 0
    %1045 = vmatpush1.bf16.msra.mxu0 0
    %1046 = vmatprep.subr.bf16.mxu0 0
    %1047 = vmatpush1.bf16.msra.mxu0 0
    %1048 = vmatprep.subr.bf16.mxu0 0
    %1049 = vmatpush1.bf16.msra.mxu0 0
    %1050 = vmatprep.subr.bf16.mxu0 0
    %1051 = vmatpush1.bf16.msra.mxu0 0
    %1052 = vmatprep.subr.bf16.mxu0 0
    %1053 = vmatpush1.bf16.msra.mxu0 %v1037
    %1054 = vmatprep.subr.bf16.mxu0 0
    %1055 = vmatpush1.bf16.msra.mxu0 %v1036
    %1056 = vmatprep.subr.bf16.mxu0 0
    %1057 = vmatpush2.bf16.msra.mxu0 0
    %1058 = vmatprep.subr.bf16.mxu0 0
    %1059 = vmatpush2.bf16.msra.mxu0 0
    %1060 = vmatprep.subr.bf16.mxu0 0
    %1061 = vmatpush2.bf16.msra.mxu0 0
    %1062 = vmatprep.subr.bf16.mxu0 0
    %1063 = vmatpush2.bf16.msra.mxu0 0
    %1064 = vmatprep.subr.bf16.mxu0 0
    %1065 = vmatpush2.bf16.msra.mxu0 0
    %1066 = vmatprep.subr.bf16.mxu0 0
    %1067 = vmatpush2.bf16.msra.mxu0 0
    %1068 = vmatprep.subr.bf16.mxu0 0
    %1069 = vmatpush2.bf16.msra.mxu0 0
    %1070 = vmatprep.subr.bf16.mxu0 0
    %1071 = vmatpush2.bf16.msra.mxu0 0
    %1072 = vmatprep.mubr.bf16.mxu0 0
    %1073 = vmatmul.mubr.bf16.gmra.mxu0 %v236
    %v1074 = vpop.f32.mrf.mxu0
    %v1075 = vadd.f32 0.0, %v1074
    %v1076 = vpop.f32.mrf.mxu0
    %v1077 = vpop.f32.mrf.mxu0
    %v1078 = vpop.f32.mrf.mxu0
    %1079 = vdwg.mxu0
    %v1080 = vadd.f32 %v1027, %v1075
    %v1081 = vxor.u32 %v1080, 2147483648
    %v1082 = vmul.f32 %v1081, 1.442695
    %v1083 = vpow.pop %v1082
    %v1084 = vadd.f32 %v1083, 1.0
    %v1085 = vrcp.pop %v1084
    %v1086 = vmul.f32 1.0, %v1085
    %v1087 = vmul.f32 %v1086, 2.0
    %v1088 = vsub.f32 %v1087, 1.0
    %v1089 = vmul.f32 %v1086, 0.0
    %1091 = vrot.lane.b32.xlu0 %v1088, 64
    %v1092 = vpop.permute.xlu0 %1091
    %v1094 = vmul.f32 %v1086, %v1092
    %1096 = vrot.lane.b32.xlu0 %v1094, 32
    %v1097 = vpop.permute.xlu0 %1096
    %v1099 = vadd.f32 %v1089, %v1097
    %v1100 = vtanh.pop %v1099
    %1102 = vrot.lane.b32.xlu0 %v1100, 64
    %v1103 = vpop.permute.xlu0 %1102
    %v1105 = vmul.f32 %v1086, %v1103
    %v1106 = vld [vmem:[%s313] sm:$0xff]
    %v1107 = vpack.c.bf16 %v1105, %v1105
    %1109 = vrot.lane.b32.xlu0 %v1107, 32
    %v1110 = vpop.permute.xlu0 %1109
    %v1112 = vsel %vm234, %v1110, 0
    %1114 = vmatprep.subr.bf16.mxu0 0
    %1115 = vmatpush1.bf16.msra.mxu0 0
    %1116 = vmatprep.subr.bf16.mxu0 0
    %1117 = vmatpush1.bf16.msra.mxu0 0
    %1118 = vmatprep.subr.bf16.mxu0 0
    %1119 = vmatpush1.bf16.msra.mxu0 0
    %1120 = vmatprep.subr.bf16.mxu0 0
    %1121 = vmatpush1.bf16.msra.mxu0 0
    %1122 = vmatprep.subr.bf16.mxu0 0
    %1123 = vmatpush1.bf16.msra.mxu0 0
    %1124 = vmatprep.subr.bf16.mxu0 0
    %1125 = vmatpush1.bf16.msra.mxu0 0
    %1126 = vmatprep.subr.bf16.mxu0 0
    %1127 = vmatpush1.bf16.msra.mxu0 %v1037
    %1128 = vmatprep.subr.bf16.mxu0 0
    %1129 = vmatpush1.bf16.msra.mxu0 %v1036
    %1130 = vmatprep.subr.bf16.mxu0 0
    %1131 = vmatpush2.bf16.msra.mxu0 0
    %1132 = vmatprep.subr.bf16.mxu0 0
    %1133 = vmatpush2.bf16.msra.mxu0 0
    %1134 = vmatprep.subr.bf16.mxu0 0
    %1135 = vmatpush2.bf16.msra.mxu0 0
    %1136 = vmatprep.subr.bf16.mxu0 0
    %1137 = vmatpush2.bf16.msra.mxu0 0
    %1138 = vmatprep.subr.bf16.mxu0 0
    %1139 = vmatpush2.bf16.msra.mxu0 0
    %1140 = vmatprep.subr.bf16.mxu0 0
    %1141 = vmatpush2.bf16.msra.mxu0 0
    %1142 = vmatprep.subr.bf16.mxu0 0
    %1143 = vmatpush2.bf16.msra.mxu0 0
    %1144 = vmatprep.subr.bf16.mxu0 0
    %1145 = vmatpush2.bf16.msra.mxu0 0
    %1146 = vmatprep.mubr.bf16.mxu0 0
    %1147 = vmatmul.mubr.bf16.gmra.mxu0 %v1112
    %v1148 = vpop.f32.mrf.mxu0
    %v1149 = vadd.f32 0.0, %v1148
    %v1150 = vpop.f32.mrf.mxu0
    %v1151 = vpop.f32.mrf.mxu0
    %v1152 = vpop.f32.mrf.mxu0
    %1153 = vdwg.mxu0
    %v1154 = vadd.f32 %v1106, %v1149
    %v1155 = vxor.u32 %v1154, 2147483648
    %v1156 = vmul.f32 %v1155, 1.442695
    %v1157 = vpow.pop %v1156
    %v1158 = vadd.f32 %v1157, 1.0
    %v1159 = vrcp.pop %v1158
    %v1160 = vmul.f32 1.0, %v1159
    %v1161 = vmul.f32 %v1160, 2.0
    %v1162 = vsub.f32 %v1161, 1.0
    %v1163 = vmul.f32 %v1160, %v1099
    %1165 = vrot.lane.b32.xlu0 %v1162, 64
    %v1166 = vpop.permute.xlu0 %1165
    %v1168 = vmul.f32 %v1160, %v1166
    %1170 = vrot.lane.b32.xlu0 %v1168, 32
    %v1171 = vpop.permute.xlu0 %1170
    %v1173 = vadd.f32 %v1163, %v1171
    %v1174 = vtanh.pop %v1173
    %1176 = vrot.lane.b32.xlu0 %v1174, 64
    %v1177 = vpop.permute.xlu0 %1176
    %v1179 = vmul.f32 %v1160, %v1177
    %v1180 = vld [vmem:[%s395] sm:$0xff]
    %v1181 = vpack.c.bf16 %v1179, %v1179
    %1183 = vrot.lane.b32.xlu0 %v1181, 32
    %v1184 = vpop.permute.xlu0 %1183
    %v1186 = vsel %vm234, %v1184, 0
    %1188 = vmatprep.subr.bf16.mxu0 0
    %1189 = vmatpush1.bf16.msra.mxu0 0
    %1190 = vmatprep.subr.bf16.mxu0 0
    %1191 = vmatpush1.bf16.msra.mxu0 0
    %1192 = vmatprep.subr.bf16.mxu0 0
    %1193 = vmatpush1.bf16.msra.mxu0 0
    %1194 = vmatprep.subr.bf16.mxu0 0
    %1195 = vmatpush1.bf16.msra.mxu0 0
    %1196 = vmatprep.subr.bf16.mxu0 0
    %1197 = vmatpush1.bf16.msra.mxu0 0
    %1198 = vmatprep.subr.bf16.mxu0 0
    %1199 = vmatpush1.bf16.msra.mxu0 0
    %1200 = vmatprep.subr.bf16.mxu0 0
    %1201 = vmatpush1.bf16.msra.mxu0 %v1037
    %1202 = vmatprep.subr.bf16.mxu0 0
    %1203 = vmatpush1.bf16.msra.mxu0 %v1036
    %1204 = vmatprep.subr.bf16.mxu0 0
    %1205 = vmatpush2.bf16.msra.mxu0 0
    %1206 = vmatprep.subr.bf16.mxu0 0
    %1207 = vmatpush2.bf16.msra.mxu0 0
    %1208 = vmatprep.subr.bf16.mxu0 0
    %1209 = vmatpush2.bf16.msra.mxu0 0
    %1210 = vmatprep.subr.bf16.mxu0 0
    %1211 = vmatpush2.bf16.msra.mxu0 0
    %1212 = vmatprep.subr.bf16.mxu0 0
    %1213 = vmatpush2.bf16.msra.mxu0 0
    %1214 = vmatprep.subr.bf16.mxu0 0
    %1215 = vmatpush2.bf16.msra.mxu0 0
    %1216 = vmatprep.subr.bf16.mxu0 0
    %1217 = vmatpush2.bf16.msra.mxu0 0
    %1218 = vmatprep.subr.bf16.mxu0 0
    %1219 = vmatpush2.bf16.msra.mxu0 0
    %1220 = vmatprep.mubr.bf16.mxu0 0
    %1221 = vmatmul.mubr.bf16.gmra.mxu0 %v1186
    %v1222 = vpop.f32.mrf.mxu0
    %v1223 = vadd.f32 0.0, %v1222
    %v1224 = vpop.f32.mrf.mxu0
    %v1225 = vpop.f32.mrf.mxu0
    %v1226 = vpop.f32.mrf.mxu0
    %1227 = vdwg.mxu0
    %v1228 = vadd.f32 %v1180, %v1223
    %v1229 = vxor.u32 %v1228, 2147483648
    %v1230 = vmul.f32 %v1229, 1.442695
    %v1231 = vpow.pop %v1230
    %v1232 = vadd.f32 %v1231, 1.0
    %v1233 = vrcp.pop %v1232
    %v1234 = vmul.f32 1.0, %v1233
    %v1235 = vmul.f32 %v1234, 2.0
    %v1236 = vsub.f32 %v1235, 1.0
    %v1237 = vmul.f32 %v1234, %v1173
    %1239 = vrot.lane.b32.xlu0 %v1236, 64
    %v1240 = vpop.permute.xlu0 %1239
    %v1242 = vmul.f32 %v1234, %v1240
    %1244 = vrot.lane.b32.xlu0 %v1242, 32
    %v1245 = vpop.permute.xlu0 %1244
    %v1247 = vadd.f32 %v1237, %v1245
    %v1248 = vtanh.pop %v1247
    %1250 = vrot.lane.b32.xlu0 %v1248, 64
    %v1251 = vpop.permute.xlu0 %1250
    %v1253 = vmul.f32 %v1234, %v1251
    %v1254 = vld [vmem:[%s477] sm:$0xff]
    %v1255 = vpack.c.bf16 %v1253, %v1253
    %1257 = vrot.lane.b32.xlu0 %v1255, 32
    %v1258 = vpop.permute.xlu0 %1257
    %v1260 = vsel %vm234, %v1258, 0
    %1262 = vmatprep.subr.bf16.mxu0 0
    %1263 = vmatpush1.bf16.msra.mxu0 0
    %1264 = vmatprep.subr.bf16.mxu0 0
    %1265 = vmatpush1.bf16.msra.mxu0 0
    %1266 = vmatprep.subr.bf16.mxu0 0
    %1267 = vmatpush1.bf16.msra.mxu0 0
    %1268 = vmatprep.subr.bf16.mxu0 0
    %1269 = vmatpush1.bf16.msra.mxu0 0
    %1270 = vmatprep.subr.bf16.mxu0 0
    %1271 = vmatpush1.bf16.msra.mxu0 0
    %1272 = vmatprep.subr.bf16.mxu0 0
    %1273 = vmatpush1.bf16.msra.mxu0 0
    %1274 = vmatprep.subr.bf16.mxu0 0
    %1275 = vmatpush1.bf16.msra.mxu0 %v1037
    %1276 = vmatprep.subr.bf16.mxu0 0
    %1277 = vmatpush1.bf16.msra.mxu0 %v1036
    %1278 = vmatprep.subr.bf16.mxu0 0
    %1279 = vmatpush2.bf16.msra.mxu0 0
    %1280 = vmatprep.subr.bf16.mxu0 0
    %1281 = vmatpush2.bf16.msra.mxu0 0
    %1282 = vmatprep.subr.bf16.mxu0 0
    %1283 = vmatpush2.bf16.msra.mxu0 0
    %1284 = vmatprep.subr.bf16.mxu0 0
    %1285 = vmatpush2.bf16.msra.mxu0 0
    %1286 = vmatprep.subr.bf16.mxu0 0
    %1287 = vmatpush2.bf16.msra.mxu0 0
    %1288 = vmatprep.subr.bf16.mxu0 0
    %1289 = vmatpush2.bf16.msra.mxu0 0
    %1290 = vmatprep.subr.bf16.mxu0 0
    %1291 = vmatpush2.bf16.msra.mxu0 0
    %1292 = vmatprep.subr.bf16.mxu0 0
    %1293 = vmatpush2.bf16.msra.mxu0 0
    %1294 = vmatprep.mubr.bf16.mxu0 0
    %1295 = vmatmul.mubr.bf16.gmra.mxu0 %v1260
    %v1296 = vpop.f32.mrf.mxu0
    %v1297 = vadd.f32 0.0, %v1296
    %v1298 = vpop.f32.mrf.mxu0
    %v1299 = vpop.f32.mrf.mxu0
    %v1300 = vpop.f32.mrf.mxu0
    %1301 = vdwg.mxu0
    %v1302 = vadd.f32 %v1254, %v1297
    %v1303 = vxor.u32 %v1302, 2147483648
    %v1304 = vmul.f32 %v1303, 1.442695
    %v1305 = vpow.pop %v1304
    %v1306 = vadd.f32 %v1305, 1.0
    %v1307 = vrcp.pop %v1306
    %v1308 = vmul.f32 1.0, %v1307
    %v1309 = vmul.f32 %v1308, 2.0
    %v1310 = vsub.f32 %v1309, 1.0
    %v1311 = vmul.f32 %v1308, %v1247
    %1313 = vrot.lane.b32.xlu0 %v1310, 64
    %v1314 = vpop.permute.xlu0 %1313
    %v1316 = vmul.f32 %v1308, %v1314
    %1318 = vrot.lane.b32.xlu0 %v1316, 32
    %v1319 = vpop.permute.xlu0 %1318
    %v1321 = vadd.f32 %v1311, %v1319
    %v1322 = vtanh.pop %v1321
    %1324 = vrot.lane.b32.xlu0 %v1322, 64
    %v1325 = vpop.permute.xlu0 %1324
    %v1327 = vmul.f32 %v1308, %v1325
    %v1328 = vld [vmem:[%s559] sm:$0xff]
    %v1329 = vpack.c.bf16 %v1327, %v1327
    %1331 = vrot.lane.b32.xlu0 %v1329, 32
    %v1332 = vpop.permute.xlu0 %1331
    %v1334 = vsel %vm234, %v1332, 0
    %1336 = vmatprep.subr.bf16.mxu0 0
    %1337 = vmatpush1.bf16.msra.mxu0 0
    %1338 = vmatprep.subr.bf16.mxu0 0
    %1339 = vmatpush1.bf16.msra.mxu0 0
    %1340 = vmatprep.subr.bf16.mxu0 0
    %1341 = vmatpush1.bf16.msra.mxu0 0
    %1342 = vmatprep.subr.bf16.mxu0 0
    %1343 = vmatpush1.bf16.msra.mxu0 0
    %1344 = vmatprep.subr.bf16.mxu0 0
    %1345 = vmatpush1.bf16.msra.mxu0 0
    %1346 = vmatprep.subr.bf16.mxu0 0
    %1347 = vmatpush1.bf16.msra.mxu0 0
    %1348 = vmatprep.subr.bf16.mxu0 0
    %1349 = vmatpush1.bf16.msra.mxu0 %v1037
    %1350 = vmatprep.subr.bf16.mxu0 0
    %1351 = vmatpush1.bf16.msra.mxu0 %v1036
    %1352 = vmatprep.subr.bf16.mxu0 0
    %1353 = vmatpush2.bf16.msra.mxu0 0
    %1354 = vmatprep.subr.bf16.mxu0 0
    %1355 = vmatpush2.bf16.msra.mxu0 0
    %1356 = vmatprep.subr.bf16.mxu0 0
    %1357 = vmatpush2.bf16.msra.mxu0 0
    %1358 = vmatprep.subr.bf16.mxu0 0
    %1359 = vmatpush2.bf16.msra.mxu0 0
    %1360 = vmatprep.subr.bf16.mxu0 0
    %1361 = vmatpush2.bf16.msra.mxu0 0
    %1362 = vmatprep.subr.bf16.mxu0 0
    %1363 = vmatpush2.bf16.msra.mxu0 0
    %1364 = vmatprep.subr.bf16.mxu0 0
    %1365 = vmatpush2.bf16.msra.mxu0 0
    %1366 = vmatprep.subr.bf16.mxu0 0
    %1367 = vmatpush2.bf16.msra.mxu0 0
    %1368 = vmatprep.mubr.bf16.mxu0 0
    %1369 = vmatmul.mubr.bf16.gmra.mxu0 %v1334
    %v1370 = vpop.f32.mrf.mxu0
    %v1371 = vadd.f32 0.0, %v1370
    %v1372 = vpop.f32.mrf.mxu0
    %v1373 = vpop.f32.mrf.mxu0
    %v1374 = vpop.f32.mrf.mxu0
    %1375 = vdwg.mxu0
    %v1376 = vadd.f32 %v1328, %v1371
    %v1377 = vxor.u32 %v1376, 2147483648
    %v1378 = vmul.f32 %v1377, 1.442695
    %v1379 = vpow.pop %v1378
    %v1380 = vadd.f32 %v1379, 1.0
    %v1381 = vrcp.pop %v1380
    %v1382 = vmul.f32 1.0, %v1381
    %v1383 = vmul.f32 %v1382, 2.0
    %v1384 = vsub.f32 %v1383, 1.0
    %v1385 = vmul.f32 %v1382, %v1321
    %1387 = vrot.lane.b32.xlu0 %v1384, 64
    %v1388 = vpop.permute.xlu0 %1387
    %v1390 = vmul.f32 %v1382, %v1388
    %1392 = vrot.lane.b32.xlu0 %v1390, 32
    %v1393 = vpop.permute.xlu0 %1392
    %v1395 = vadd.f32 %v1385, %v1393
    %v1396 = vtanh.pop %v1395
    %1398 = vrot.lane.b32.xlu0 %v1396, 64
    %v1399 = vpop.permute.xlu0 %1398
    %v1401 = vmul.f32 %v1382, %v1399
    %v1402 = vld [vmem:[%s641] sm:$0xff]
    %v1403 = vpack.c.bf16 %v1401, %v1401
    %1405 = vrot.lane.b32.xlu0 %v1403, 32
    %v1406 = vpop.permute.xlu0 %1405
    %v1408 = vsel %vm234, %v1406, 0
    %1410 = vmatprep.subr.bf16.mxu0 0
    %1411 = vmatpush1.bf16.msra.mxu0 0
    %1412 = vmatprep.subr.bf16.mxu0 0
    %1413 = vmatpush1.bf16.msra.mxu0 0
    %1414 = vmatprep.subr.bf16.mxu0 0
    %1415 = vmatpush1.bf16.msra.mxu0 0
    %1416 = vmatprep.subr.bf16.mxu0 0
    %1417 = vmatpush1.bf16.msra.mxu0 0
    %1418 = vmatprep.subr.bf16.mxu0 0
    %1419 = vmatpush1.bf16.msra.mxu0 0
    %1420 = vmatprep.subr.bf16.mxu0 0
    %1421 = vmatpush1.bf16.msra.mxu0 0
    %1422 = vmatprep.subr.bf16.mxu0 0
    %1423 = vmatpush1.bf16.msra.mxu0 %v1037
    %1424 = vmatprep.subr.bf16.mxu0 0
    %1425 = vmatpush1.bf16.msra.mxu0 %v1036
    %1426 = vmatprep.subr.bf16.mxu0 0
    %1427 = vmatpush2.bf16.msra.mxu0 0
    %1428 = vmatprep.subr.bf16.mxu0 0
    %1429 = vmatpush2.bf16.msra.mxu0 0
    %1430 = vmatprep.subr.bf16.mxu0 0
    %1431 = vmatpush2.bf16.msra.mxu0 0
    %1432 = vmatprep.subr.bf16.mxu0 0
    %1433 = vmatpush2.bf16.msra.mxu0 0
    %1434 = vmatprep.subr.bf16.mxu0 0
    %1435 = vmatpush2.bf16.msra.mxu0 0
    %1436 = vmatprep.subr.bf16.mxu0 0
    %1437 = vmatpush2.bf16.msra.mxu0 0
    %1438 = vmatprep.subr.bf16.mxu0 0
    %1439 = vmatpush2.bf16.msra.mxu0 0
    %1440 = vmatprep.subr.bf16.mxu0 0
    %1441 = vmatpush2.bf16.msra.mxu0 0
    %1442 = vmatprep.mubr.bf16.mxu0 0
    %1443 = vmatmul.mubr.bf16.gmra.mxu0 %v1408
    %v1444 = vpop.f32.mrf.mxu0
    %v1445 = vadd.f32 0.0, %v1444
    %v1446 = vpop.f32.mrf.mxu0
    %v1447 = vpop.f32.mrf.mxu0
    %v1448 = vpop.f32.mrf.mxu0
    %1449 = vdwg.mxu0
    %v1450 = vadd.f32 %v1402, %v1445
    %v1451 = vxor.u32 %v1450, 2147483648
    %v1452 = vmul.f32 %v1451, 1.442695
    %v1453 = vpow.pop %v1452
    %v1454 = vadd.f32 %v1453, 1.0
    %v1455 = vrcp.pop %v1454
    %v1456 = vmul.f32 1.0, %v1455
    %v1457 = vmul.f32 %v1456, 2.0
    %v1458 = vsub.f32 %v1457, 1.0
    %v1459 = vmul.f32 %v1456, %v1395
    %1461 = vrot.lane.b32.xlu0 %v1458, 64
    %v1462 = vpop.permute.xlu0 %1461
    %v1464 = vmul.f32 %v1456, %v1462
    %1466 = vrot.lane.b32.xlu0 %v1464, 32
    %v1467 = vpop.permute.xlu0 %1466
    %v1469 = vadd.f32 %v1459, %v1467
    %v1470 = vtanh.pop %v1469
    %1472 = vrot.lane.b32.xlu0 %v1470, 64
    %v1473 = vpop.permute.xlu0 %1472
    %v1475 = vmul.f32 %v1456, %v1473
    %v1476 = vld [vmem:[%s723] sm:$0xff]
    %v1477 = vpack.c.bf16 %v1475, %v1475
    %1479 = vrot.lane.b32.xlu0 %v1477, 32
    %v1480 = vpop.permute.xlu0 %1479
    %v1482 = vsel %vm234, %v1480, 0
    %1484 = vmatprep.subr.bf16.mxu0 0
    %1485 = vmatpush1.bf16.msra.mxu0 0
    %1486 = vmatprep.subr.bf16.mxu0 0
    %1487 = vmatpush1.bf16.msra.mxu0 0
    %1488 = vmatprep.subr.bf16.mxu0 0
    %1489 = vmatpush1.bf16.msra.mxu0 0
    %1490 = vmatprep.subr.bf16.mxu0 0
    %1491 = vmatpush1.bf16.msra.mxu0 0
    %1492 = vmatprep.subr.bf16.mxu0 0
    %1493 = vmatpush1.bf16.msra.mxu0 0
    %1494 = vmatprep.subr.bf16.mxu0 0
    %1495 = vmatpush1.bf16.msra.mxu0 0
    %1496 = vmatprep.subr.bf16.mxu0 0
    %1497 = vmatpush1.bf16.msra.mxu0 %v1037
    %1498 = vmatprep.subr.bf16.mxu0 0
    %1499 = vmatpush1.bf16.msra.mxu0 %v1036
    %1500 = vmatprep.subr.bf16.mxu0 0
    %1501 = vmatpush2.bf16.msra.mxu0 0
    %1502 = vmatprep.subr.bf16.mxu0 0
    %1503 = vmatpush2.bf16.msra.mxu0 0
    %1504 = vmatprep.subr.bf16.mxu0 0
    %1505 = vmatpush2.bf16.msra.mxu0 0
    %1506 = vmatprep.subr.bf16.mxu0 0
    %1507 = vmatpush2.bf16.msra.mxu0 0
    %1508 = vmatprep.subr.bf16.mxu0 0
    %1509 = vmatpush2.bf16.msra.mxu0 0
    %1510 = vmatprep.subr.bf16.mxu0 0
    %1511 = vmatpush2.bf16.msra.mxu0 0
    %1512 = vmatprep.subr.bf16.mxu0 0
    %1513 = vmatpush2.bf16.msra.mxu0 0
    %1514 = vmatprep.subr.bf16.mxu0 0
    %1515 = vmatpush2.bf16.msra.mxu0 0
    %1516 = vmatprep.mubr.bf16.mxu0 0
    %1517 = vmatmul.mubr.bf16.gmra.mxu0 %v1482
    %v1518 = vpop.f32.mrf.mxu0
    %v1519 = vadd.f32 0.0, %v1518
    %v1520 = vpop.f32.mrf.mxu0
    %v1521 = vpop.f32.mrf.mxu0
    %v1522 = vpop.f32.mrf.mxu0
    %1523 = vdwg.mxu0
    %v1524 = vadd.f32 %v1476, %v1519
    %v1525 = vxor.u32 %v1524, 2147483648
    %v1526 = vmul.f32 %v1525, 1.442695
    %v1527 = vpow.pop %v1526
    %v1528 = vadd.f32 %v1527, 1.0
    %v1529 = vrcp.pop %v1528
    %v1530 = vmul.f32 1.0, %v1529
    %v1531 = vmul.f32 %v1530, 2.0
    %v1532 = vsub.f32 %v1531, 1.0
    %v1533 = vmul.f32 %v1530, %v1469
    %1535 = vrot.lane.b32.xlu0 %v1532, 64
    %v1536 = vpop.permute.xlu0 %1535
    %v1538 = vmul.f32 %v1530, %v1536
    %1540 = vrot.lane.b32.xlu0 %v1538, 32
    %v1541 = vpop.permute.xlu0 %1540
    %v1543 = vadd.f32 %v1533, %v1541
    %v1544 = vtanh.pop %v1543
    %1546 = vrot.lane.b32.xlu0 %v1544, 64
    %v1547 = vpop.permute.xlu0 %1546
    %v1549 = vmul.f32 %v1530, %v1547
    %v1550 = vld [vmem:[%s805] sm:$0xff]
    %v1551 = vpack.c.bf16 %v1549, %v1549
    %1553 = vrot.lane.b32.xlu0 %v1551, 32
    %v1554 = vpop.permute.xlu0 %1553
    %v1556 = vsel %vm234, %v1554, 0
    %1558 = vmatprep.subr.bf16.mxu0 0
    %1559 = vmatpush1.bf16.msra.mxu0 0
    %1560 = vmatprep.subr.bf16.mxu0 0
    %1561 = vmatpush1.bf16.msra.mxu0 0
    %1562 = vmatprep.subr.bf16.mxu0 0
    %1563 = vmatpush1.bf16.msra.mxu0 0
    %1564 = vmatprep.subr.bf16.mxu0 0
    %1565 = vmatpush1.bf16.msra.mxu0 0
    %1566 = vmatprep.subr.bf16.mxu0 0
    %1567 = vmatpush1.bf16.msra.mxu0 0
    %1568 = vmatprep.subr.bf16.mxu0 0
    %1569 = vmatpush1.bf16.msra.mxu0 0
    %1570 = vmatprep.subr.bf16.mxu0 0
    %1571 = vmatpush1.bf16.msra.mxu0 %v1037
    %1572 = vmatprep.subr.bf16.mxu0 0
    %1573 = vmatpush1.bf16.msra.mxu0 %v1036
    %1574 = vmatprep.subr.bf16.mxu0 0
    %1575 = vmatpush2.bf16.msra.mxu0 0
    %1576 = vmatprep.subr.bf16.mxu0 0
    %1577 = vmatpush2.bf16.msra.mxu0 0
    %1578 = vmatprep.subr.bf16.mxu0 0
    %1579 = vmatpush2.bf16.msra.mxu0 0
    %1580 = vmatprep.subr.bf16.mxu0 0
    %1581 = vmatpush2.bf16.msra.mxu0 0
    %1582 = vmatprep.subr.bf16.mxu0 0
    %1583 = vmatpush2.bf16.msra.mxu0 0
    %1584 = vmatprep.subr.bf16.mxu0 0
    %1585 = vmatpush2.bf16.msra.mxu0 0
    %1586 = vmatprep.subr.bf16.mxu0 0
    %1587 = vmatpush2.bf16.msra.mxu0 0
    %1588 = vmatprep.subr.bf16.mxu0 0
    %1589 = vmatpush2.bf16.msra.mxu0 0
    %1590 = vmatprep.mubr.bf16.mxu0 0
    %1591 = vmatmul.mubr.bf16.gmra.mxu0 %v1556
    %v1592 = vpop.f32.mrf.mxu0
    %v1593 = vadd.f32 0.0, %v1592
    %v1594 = vpop.f32.mrf.mxu0
    %v1595 = vpop.f32.mrf.mxu0
    %v1596 = vpop.f32.mrf.mxu0
    %1597 = vdwg.mxu0
    %v1598 = vadd.f32 %v1550, %v1593
    %v1599 = vxor.u32 %v1598, 2147483648
    %v1600 = vmul.f32 %v1599, 1.442695
    %v1601 = vpow.pop %v1600
    %v1602 = vadd.f32 %v1601, 1.0
    %v1603 = vrcp.pop %v1602
    %v1604 = vmul.f32 1.0, %v1603
    %v1605 = vmul.f32 %v1604, 2.0
    %v1606 = vsub.f32 %v1605, 1.0
    %v1607 = vmul.f32 %v1604, %v1543
    %1609 = vrot.lane.b32.xlu0 %v1606, 64
    %v1610 = vpop.permute.xlu0 %1609
    %v1612 = vmul.f32 %v1604, %v1610
    %1614 = vrot.lane.b32.xlu0 %v1612, 32
    %v1615 = vpop.permute.xlu0 %1614
    %v1617 = vadd.f32 %v1607, %v1615
    %v1618 = vtanh.pop %v1617
    %1620 = vrot.lane.b32.xlu0 %v1618, 64
    %v1621 = vpop.permute.xlu0 %1620
    %v1623 = vmul.f32 %v1604, %v1621
    %v1624 = vld [vmem:[%s7] sm:$0xff]
    %v1625 = vld [vmem:[%s7 + $0x8] sm:$0xff]
    %v1626 = vld [vmem:[%s7 + $0x10] sm:$0xff]
    %v1627 = vld [vmem:[%s7 + $0x18] sm:$0xff]
    %v1628 = vld [vmem:[%s8] sm:$0x1]
    %v1630 = vlaneseq
    %v1631 = vshrl.u32 %v1630, 7
    %v1632 = vsub.s32 0, %v1631
    %v1633 = vrot.slane %v1628, %v1632
    %1636 = vrot.lane.b32.xlu0 %v1623, 32
    %v1637 = vpop.permute.xlu0 %1636
    %v1638 = vsel %vm234, %v1637, 0
    %1640 = vmatprep.subr.mxu0 0.0
    %1641 = vmatpush1.msra.mxu0 0.0
    %1642 = vmatprep.subr.mxu0 0.0
    %1643 = vmatpush1.msra.mxu0 0.0
    %1644 = vmatprep.subr.mxu0 0.0
    %1645 = vmatpush1.msra.mxu0 0.0
    %1646 = vmatprep.subr.mxu0 0.0
    %1647 = vmatpush1.msra.mxu0 0.0
    %1648 = vmatprep.subr.mxu0 0.0
    %1649 = vmatpush1.msra.mxu0 0.0
    %1650 = vmatprep.subr.mxu0 0.0
    %1651 = vmatpush1.msra.mxu0 0.0
    %1652 = vmatprep.subr.mxu0 0.0
    %1653 = vmatpush1.msra.mxu0 0.0
    %1654 = vmatprep.subr.mxu0 0.0
    %1655 = vmatpush1.msra.mxu0 0.0
    %1656 = vmatprep.subr.mxu0 0.0
    %1657 = vmatpush1.msra.mxu0 0.0
    %1658 = vmatprep.subr.mxu0 0.0
    %1659 = vmatpush1.msra.mxu0 0.0
    %1660 = vmatprep.subr.mxu0 0.0
    %1661 = vmatpush1.msra.mxu0 0.0
    %1662 = vmatprep.subr.mxu0 0.0
    %1663 = vmatpush1.msra.mxu0 0.0
    %1664 = vmatprep.subr.mxu0 0.0
    %1665 = vmatpush1.msra.mxu0 %v1627
    %1666 = vmatprep.subr.mxu0 0.0
    %1667 = vmatpush1.msra.mxu0 %v1626
    %1668 = vmatprep.subr.mxu0 0.0
    %1669 = vmatpush1.msra.mxu0 %v1625
    %1670 = vmatprep.subr.mxu0 0.0
    %1671 = vmatpush1.msra.mxu0 %v1624
    %1672 = vmatprep.subr.mxu0 0.0
    %1673 = vmatpush2.msra.mxu0 0.0
    %1674 = vmatprep.subr.mxu0 0.0
    %1675 = vmatpush2.msra.mxu0 0.0
    %1676 = vmatprep.subr.mxu0 0.0
    %1677 = vmatpush2.msra.mxu0 0.0
    %1678 = vmatprep.subr.mxu0 0.0
    %1679 = vmatpush2.msra.mxu0 0.0
    %1680 = vmatprep.subr.mxu0 0.0
    %1681 = vmatpush2.msra.mxu0 0.0
    %1682 = vmatprep.subr.mxu0 0.0
    %1683 = vmatpush2.msra.mxu0 0.0
    %1684 = vmatprep.subr.mxu0 0.0
    %1685 = vmatpush2.msra.mxu0 0.0
    %1686 = vmatprep.subr.mxu0 0.0
    %1687 = vmatpush2.msra.mxu0 0.0
    %1688 = vmatprep.subr.mxu0 0.0
    %1689 = vmatpush2.msra.mxu0 0.0
    %1690 = vmatprep.subr.mxu0 0.0
    %1691 = vmatpush2.msra.mxu0 0.0
    %1692 = vmatprep.subr.mxu0 0.0
    %1693 = vmatpush2.msra.mxu0 0.0
    %1694 = vmatprep.subr.mxu0 0.0
    %1695 = vmatpush2.msra.mxu0 0.0
    %1696 = vmatprep.subr.mxu0 0.0
    %1697 = vmatpush2.msra.mxu0 0.0
    %1698 = vmatprep.subr.mxu0 0.0
    %1699 = vmatpush2.msra.mxu0 0.0
    %1700 = vmatprep.subr.mxu0 0.0
    %1701 = vmatpush2.msra.mxu0 0.0
    %1702 = vmatprep.subr.mxu0 0.0
    %1703 = vmatpush2.msra.mxu0 0.0
    %1704 = vmatprep.mubr.f32.mxu0 0.0
    %1705 = vmatmul.mubr.f32.gmra.mxu0 %v1638
    %v1706 = vpop.f32.mrf.mxu0
    %v1707 = vadd.f32 %v1633, %v1706
    %v1708 = vpop.f32.mrf.mxu0
    %1709 = vdwg.mxu0
    %vm1710 = vcmask 31744
    %1711 = vst.msk [vmem:[%s9] sm:$0xff] %vm1710, %v1707
    // Predicated region
    $region54: #{tpu_custom_call.1} parent=1 // pred_check
      _
    $region55: #{tpu_custom_call.1} parent=1 // pred_check_branch
      %1713 = sbr.rel (0) target = $region57
    $region56: #{tpu_custom_call.1} parent=1 // pred_region
      _
    $region57: #{tpu_custom_call.1} parent=1 // pred_fallthru
      _
    // Predicated region
    $region58: #{tpu_custom_call.1} parent=1 // pred_check
      _
    $region59: #{tpu_custom_call.1} parent=1 // pred_check_branch
      %1715 = sbr.rel (0) target = $region61
    $region60: #{tpu_custom_call.1} parent=1 // pred_region
      _
    $region61: #{tpu_custom_call.1} parent=1 // pred_fallthru
      _
    %1716 = vsyncpa [#allocation5], 1
    %1717 = vsyncpa [#allocation7], 1
    %1718 = vsyncpa [#allocation10], 1

</llo_original>
